<compile_context>
chip_gen: v7x
topology: tpu7x:2x2x1
jax: 0.10.0
libtpu: 0.0.40
codegen_flags: <defaults>
</compile_context>

<pallas_src>
import functools

import jax
import jax.numpy as jnp
from jax import lax
from jax.experimental import pallas as pl
from jax.experimental.pallas import tpu as pltpu


# ---------------------------------------------------------------------------
# Fused Pallas kernel: all LSTM layers + final Linear (one batch chunk)
# ---------------------------------------------------------------------------
def _fused_lstm_kernel(x_ref, wih0_ref, wihr_ref, whh_ref, b_ref,
                       wout_ref, bout_ref, out_ref,
                       gx_ref, seq_ref, *, T, BB):
    """Fused multi-layer LSTM + Linear for one batch chunk of BB rows.

    x_ref:    (T*BB, D)      bf16, time-major flattened input chunk
    wih0_ref: (D, 4H)        bf16, layer-0 input->hidden (transposed, gate-scaled)
    wihr_ref: (max(L-1,1), H, 4H) bf16, layers 1.. input->hidden
    whh_ref:  (L, H, 4H)     bf16, hidden->hidden (transposed, gate-scaled)
    b_ref:    (L, 1, 4H)     f32, fused biases (b_ih + b_hh, gate-scaled)
    wout_ref: (H, O)         bf16, final Linear weights (transposed)
    bout_ref: (1, O)         f32, final Linear bias
    out_ref:  (BB, O)        f32 output
    gx_ref:   (T*BB, 4H)     f32 VMEM scratch: hoisted input projections
    seq_ref:  (T*BB, H)      bf16 VMEM scratch: inter-layer activations
    """
    L = whh_ref.shape[0]
    H = whh_ref.shape[1]

    def run_layer(whh_bf, write_seq):
        """Serial recurrence over T steps; input projections already in gx_ref."""

        def step(row, h, c):
            gates = gx_ref[pl.ds(row, BB), :] + jnp.dot(
                h.astype(jnp.bfloat16), whh_bf,
                preferred_element_type=jnp.float32)            # (BB, 4H) f32
            # Single wide tanh: sigmoid was folded into the weights
            # (sigmoid(x) = 0.5*(tanh(x/2)+1), x/2 pre-applied to i/f/o cols).
            th = jnp.tanh(gates)
            i_g = 0.5 * th[:, 0 * H:1 * H] + 0.5
            f_g = 0.5 * th[:, 1 * H:2 * H] + 0.5
            g_g = th[:, 2 * H:3 * H]
            o_g = 0.5 * th[:, 3 * H:4 * H] + 0.5
            c = f_g * c + i_g * g_g
            h = o_g * jnp.tanh(c)
            if write_seq:
                seq_ref[pl.ds(row, BB), :] = h.astype(seq_ref.dtype)
            return h, c

        h = jnp.zeros((BB, H), jnp.float32)
        c = jnp.zeros((BB, H), jnp.float32)
        if T <= 16:
            # Small T: fully unrolled so the scheduler sees across steps.
            for t in range(T):
                h, c = step(t * BB, h, c)
        else:
            # Large T: bounded unroll keeps code size / vreg pressure in check.
            def body(t, carry):
                hh, cc = carry
                return step(pl.multiple_of(t * BB, BB), hh, cc)
            h, c = lax.fori_loop(0, T, body, (h, c), unroll=4)
        return h

    # ---- Layer 0: hoist the input projection into one big MXU matmul. ----
    gx_ref[...] = (
        jnp.dot(x_ref[...], wih0_ref[...], preferred_element_type=jnp.float32)
        + b_ref[0]
    )
    h_last = run_layer(whh_ref[0], write_seq=(L > 1))

    # ---- Layers 1 .. L-1: project the previous layer's whole sequence. ----
    for l in range(1, L):
        gx_ref[...] = (
            jnp.dot(seq_ref[...], wihr_ref[l - 1],
                    preferred_element_type=jnp.float32)
            + b_ref[l]
        )
        h_last = run_layer(whh_ref[l], write_seq=(l < L - 1))

    # ---- Final Linear on the last-timestep hidden state. ----
    out_ref[...] = (
        jnp.dot(h_last.astype(jnp.bfloat16), wout_ref[...],
                preferred_element_type=jnp.float32)
        + bout_ref[...]
    )


def _run_fused(x3, wih0_t, wihr_t, whh_t, bias, w_out_t, b_out, *, T, BB, NB):
    D = x3.shape[-1]
    L, H, G = whh_t.shape
    O = w_out_t.shape[1]
    kernel = functools.partial(_fused_lstm_kernel, T=T, BB=BB)
    return pl.pallas_call(
        kernel,
        out_shape=jax.ShapeDtypeStruct((NB, BB, O), jnp.float32),
        grid=(NB,),
        in_specs=[
            pl.BlockSpec((None, T * BB, D), lambda b: (b, 0, 0)),
            pl.BlockSpec((D, G), lambda b: (0, 0)),
            pl.BlockSpec(wihr_t.shape, lambda b: (0, 0, 0)),
            pl.BlockSpec((L, H, G), lambda b: (0, 0, 0)),
            pl.BlockSpec((L, 1, G), lambda b: (0, 0, 0)),
            pl.BlockSpec((H, O), lambda b: (0, 0)),
            pl.BlockSpec((1, O), lambda b: (0, 0)),
        ],
        out_specs=pl.BlockSpec((None, BB, O), lambda b: (b, 0, 0)),
        scratch_shapes=[
            pltpu.VMEM((T * BB, G), jnp.float32),    # gx: hoisted projections
            pltpu.VMEM((T * BB, H), jnp.bfloat16),   # seq: inter-layer activations
        ],
        compiler_params=pltpu.CompilerParams(
            dimension_semantics=("parallel",),       # batch chunks are independent
            vmem_limit_bytes=32 * 1024 * 1024,
        ),
    )(x3, wih0_t, wihr_t, whh_t, bias, w_out_t, b_out)


# ---------------------------------------------------------------------------
# Public wrapper
# ---------------------------------------------------------------------------
@jax.jit
def lstm_forward(X, params):
    """X: (B, T, num_inputs) f32.  Returns (B, num_outputs) f32."""
    B, T, D = X.shape
    # Pad the batch to a multiple of 8 (sublane granularity).
    B_pad = ((B + 7) // 8) * 8
    # Two sublane-aligned batch chunks when possible (feeds both TCs on v7x).
    NB = 2 if (B_pad % 16 == 0) else 1
    BB = B_pad // NB
    x = jnp.transpose(X, (1, 0, 2))                       # (T, B, D) time-major
    if B_pad != B:
        x = jnp.pad(x, ((0, 0), (0, B_pad - B), (0, 0)))
    # (T, B_pad, D) -> (NB, T*BB, D): rows t*BB..(t+1)*BB-1 of chunk n = step t.
    x = x.reshape(T, NB, BB, D).transpose(1, 0, 2, 3).reshape(NB, T * BB, D)
    x = x.astype(jnp.bfloat16)
    out = _run_fused(
        x,
        params["wih0_t"], params["wihr_t"], params["whh_t"], params["bias"],
        params["w_out_t"], params["b_out"],
        T=T, BB=BB, NB=NB,
    )                                                     # (NB, BB, O)
    out = out.reshape(B_pad, -1)
    return out[:B]


# ---------------------------------------------------------------------------
# Parameters: raw nn.LSTM/nn.Linear-style init + kernel packing
# ---------------------------------------------------------------------------
def init_params(key, num_inputs, num_hiddens, num_outputs, num_layers):
    """Raw f32 parameters with nn.LSTM / nn.Linear shapes and init."""
    H = num_hiddens
    bound = 1.0 / (H ** 0.5)
    layers = []
    for layer in range(num_layers):
        d_in = num_inputs if layer == 0 else H
        key, k1, k2, k3, k4 = jax.random.split(key, 5)
        layers.append(dict(
            w_ih=jax.random.uniform(k1, (4 * H, d_in), jnp.float32, -bound, bound),
            w_hh=jax.random.uniform(k2, (4 * H, H), jnp.float32, -bound, bound),
            b_ih=jax.random.uniform(k3, (4 * H,), jnp.float32, -bound, bound),
            b_hh=jax.random.uniform(k4, (4 * H,), jnp.float32, -bound, bound),
        ))
    key, k5, k6 = jax.random.split(key, 3)
    w_out = jax.random.uniform(k5, (num_outputs, H), jnp.float32, -bound, bound)
    b_out = jax.random.uniform(k6, (num_outputs,), jnp.float32, -bound, bound)
    return {"layers": layers, "w_out": w_out, "b_out": b_out}


def pack_params(raw):
    """Transpose, fuse biases, fold sigmoid (x/2 pre-scale on i/f/o gate
    columns so sigmoid(x) = 0.5*(tanh(x/2)+1) inside the kernel), cast MXU
    operands to bf16."""
    layers = raw["layers"]
    H = layers[0]["w_hh"].shape[1]
    scale = jnp.concatenate([
        jnp.full((H,), 0.5, jnp.float32),   # i
        jnp.full((H,), 0.5, jnp.float32),   # f
        jnp.ones((H,), jnp.float32),        # g (true tanh gate, unscaled)
        jnp.full((H,), 0.5, jnp.float32),   # o
    ])
    wih0 = None
    wihr, whh, bias = [], [], []
    for l, p in enumerate(layers):
        wih_t = p["w_ih"].T * scale[None, :]
        whh_t = p["w_hh"].T * scale[None, :]
        b = ((p["b_ih"] + p["b_hh"]) * scale).reshape(1, 4 * H)
        if l == 0:
            wih0 = wih_t.astype(jnp.bfloat16)
        else:
            wihr.append(wih_t.astype(jnp.bfloat16))
        whh.append(whh_t.astype(jnp.bfloat16))
        bias.append(b)
    if not wihr:  # L == 1: dummy (unused) stacked tensor so shapes stay static
        wihr = [jnp.zeros((H, 4 * H), jnp.bfloat16)]
    return {
        "wih0_t": wih0,                                   # (D, 4H) bf16
        "wihr_t": jnp.stack(wihr),                        # (max(L-1,1), H, 4H) bf16
        "whh_t": jnp.stack(whh),                          # (L, H, 4H) bf16
        "bias": jnp.stack(bias).astype(jnp.float32),      # (L, 1, 4H) f32
        "w_out_t": raw["w_out"].T.astype(jnp.bfloat16),   # (H, O) bf16
        "b_out": raw["b_out"].reshape(1, -1).astype(jnp.float32),
    }


# ---------------------------------------------------------------------------
# Pure-JAX f32 reference (nn.LSTM eval forward semantics)
# ---------------------------------------------------------------------------
def lstm_forward_ref(X, raw):
    B = X.shape[0]
    L = len(raw["layers"])
    H = raw["layers"][0]["w_hh"].shape[1]
    x = X  # (B, T, D)
    for l in range(L):
        p = raw["layers"][l]
        wih_t = p["w_ih"].T
        whh_t = p["w_hh"].T
        b = (p["b_ih"] + p["b_hh"]).reshape(1, 4 * H)
        h = jnp.zeros((B, H), jnp.float32)
        c = jnp.zeros((B, H), jnp.float32)

        def step(carry, x_t, wih_t=wih_t, whh_t=whh_t, b=b):
            h, c = carry
            g = x_t @ wih_t + h @ whh_t + b
            i = jax.nn.sigmoid(g[:, 0 * H:1 * H])
            f = jax.nn.sigmoid(g[:, 1 * H:2 * H])
            gg = jnp.tanh(g[:, 2 * H:3 * H])
            o = jax.nn.sigmoid(g[:, 3 * H:4 * H])
            c = f * c + i * gg
            h = o * jnp.tanh(c)
            return (h, c), h

        (_, _), ys = lax.scan(step, (h, c), jnp.transpose(x, (1, 0, 2)))
        x = jnp.transpose(ys, (1, 0, 2))
    return x[:, -1, :] @ raw["w_out"].T + raw["b_out"].reshape(1, -1)


# ---------------------------------------------------------------------------
if __name__ == "__main__":
    num_inputs, num_hiddens, num_outputs, num_layers = 16, 32, 8, 2
    batch_size, seq_len = 4, 8

    key = jax.random.PRNGKey(0)
    kx, kp = jax.random.split(key)
    X = jax.random.normal(kx, (batch_size, seq_len, num_inputs), jnp.float32)
    raw = init_params(kp, num_inputs, num_hiddens, num_outputs, num_layers)
    params = pack_params(raw)

    out = lstm_forward(X, params)
    out = jax.block_until_ready(out)

    ref = lstm_forward_ref(X, raw)
    assert out.shape == (batch_size, num_outputs)
    # Looser tolerance: kernel uses bf16 MXU operands (f32 accumulation).
    assert jnp.allclose(out, ref, atol=5e-2, rtol=5e-2), "mismatch vs reference"

    print("KERNEL_OK")
</pallas_src>

<mosaic_0001>
module attributes {stable_mosaic.version = 11 : i64} {
  func.func @_fused_lstm_kernel(%arg0: i32, %arg1: memref<1x64x16xbf16, #tpu.memory_space<vmem>>, %arg2: memref<16x128xbf16, #tpu.memory_space<vmem>>, %arg3: memref<1x32x128xbf16, #tpu.memory_space<vmem>>, %arg4: memref<2x32x128xbf16, #tpu.memory_space<vmem>>, %arg5: memref<2x1x128xf32, #tpu.memory_space<vmem>>, %arg6: memref<32x8xbf16, #tpu.memory_space<vmem>>, %arg7: memref<1x8xf32, #tpu.memory_space<vmem>>, %arg8: memref<1x8x8xf32, #tpu.memory_space<vmem>>, %arg9: memref<64x128xf32, #tpu.memory_space<vmem>>, %arg10: memref<64x32xbf16, #tpu.memory_space<vmem>>) attributes {dimension_semantics = [#tpu.dimension_semantics<parallel>], iteration_bounds = array<i64: 1>, scalar_prefetch = 0 : i64, scratch_operands = 2 : i64, tpu.core_type = #tpu.core_type<tc>, window_params = [{transform_indices = @transform_0, window_bounds = array<i64: 1, 64, 16>}, {pipeline_mode = #tpu.pipeline_mode<synchronous>, transform_indices = @transform_1, window_bounds = array<i64: 16, 128>}, {pipeline_mode = #tpu.pipeline_mode<synchronous>, transform_indices = @transform_2, window_bounds = array<i64: 1, 32, 128>}, {pipeline_mode = #tpu.pipeline_mode<synchronous>, transform_indices = @transform_3, window_bounds = array<i64: 2, 32, 128>}, {pipeline_mode = #tpu.pipeline_mode<synchronous>, transform_indices = @transform_4, window_bounds = array<i64: 2, 1, 128>}, {pipeline_mode = #tpu.pipeline_mode<synchronous>, transform_indices = @transform_5, window_bounds = array<i64: 32, 8>}, {pipeline_mode = #tpu.pipeline_mode<synchronous>, transform_indices = @transform_6, window_bounds = array<i64: 1, 8>}, {transform_indices = @transform_7, window_bounds = array<i64: 1, 8, 8>}]} {
    %c0 = arith.constant 0 : index
    %c0_0 = arith.constant 0 : index
    %c0_1 = arith.constant 0 : index
    %0 = vector.load %arg1[%c0, %c0_0, %c0_1] : memref<1x64x16xbf16, #tpu.memory_space<vmem>>, vector<1x64x16xbf16>
    %1 = vector.shape_cast %0 : vector<1x64x16xbf16> to vector<64x16xbf16>
    %c0_2 = arith.constant 0 : index
    %c0_3 = arith.constant 0 : index
    %2 = vector.load %arg2[%c0_2, %c0_3] : memref<16x128xbf16, #tpu.memory_space<vmem>>, vector<16x128xbf16>
    %cst = arith.constant dense<0.000000e+00> : vector<64x128xf32>
    %3 = tpu.matmul %1, %2, %cst {dimension_numbers = #tpu.dot_dimension_numbers<[1], [0], [0], [1], [0, 0, 1, 1], [], []>} : vector<64x16xbf16>, vector<16x128xbf16>, vector<64x128xf32> -> vector<64x128xf32>
    %c0_4 = arith.constant 0 : index
    %c0_5 = arith.constant 0 : index
    %c0_6 = arith.constant 0 : index
    %4 = vector.load %arg5[%c0_4, %c0_5, %c0_6] : memref<2x1x128xf32, #tpu.memory_space<vmem>>, vector<1x1x128xf32>
    %5 = vector.shape_cast %4 : vector<1x1x128xf32> to vector<1x128xf32>
    %6 = vector.broadcast %5 : vector<1x128xf32> to vector<64x128xf32>
    %7 = arith.addf %3, %6 : vector<64x128xf32>
    %c0_7 = arith.constant 0 : index
    %c0_8 = arith.constant 0 : index
    %8 = vector.load %arg9[%c0_7, %c0_8] : memref<64x128xf32, #tpu.memory_space<vmem>>, vector<64x128xf32>
    tpu.vector_store %arg9[%c0_7, %c0_8], %7 {strides = array<i32>} : memref<64x128xf32, #tpu.memory_space<vmem>>, vector<64x128xf32>,
    %c0_9 = arith.constant 0 : index
    %c0_10 = arith.constant 0 : index
    %c0_11 = arith.constant 0 : index
    %9 = vector.load %arg4[%c0_9, %c0_10, %c0_11] : memref<2x32x128xbf16, #tpu.memory_space<vmem>>, vector<1x32x128xbf16>
    %10 = vector.shape_cast %9 : vector<1x32x128xbf16> to vector<32x128xbf16>
    %cst_12 = arith.constant 0.000000e+00 : f32
    %11 = vector.broadcast %cst_12 : f32 to vector<8x32xf32>
    %cst_13 = arith.constant 0.000000e+00 : f32
    %12 = vector.broadcast %cst_13 : f32 to vector<8x32xf32>
    %c0_14 = arith.constant 0 : index
    %c0_15 = arith.constant 0 : index
    %13 = vector.load %arg9[%c0_14, %c0_15] : memref<64x128xf32, #tpu.memory_space<vmem>>, vector<8x128xf32>
    %14 = arith.truncf %11 : vector<8x32xf32> to vector<8x32xbf16>
    %cst_16 = arith.constant dense<0.000000e+00> : vector<8x128xf32>
    %15 = tpu.matmul %14, %10, %cst_16 {dimension_numbers = #tpu.dot_dimension_numbers<[1], [0], [0], [1], [0, 0, 1, 1], [], []>} : vector<8x32xbf16>, vector<32x128xbf16>, vector<8x128xf32> -> vector<8x128xf32>
    %16 = arith.addf %13, %15 : vector<8x128xf32>
    %17 = math.tanh %16 : vector<8x128xf32>
    %18 = vector.extract_strided_slice %17 {offsets = [0, 0], sizes = [8, 32], strides = [1, 1]} : vector<8x128xf32> to vector<8x32xf32>
    %cst_17 = arith.constant 5.000000e-01 : f32
    %19 = vector.broadcast %cst_17 : f32 to vector<8x32xf32>
    %20 = arith.mulf %19, %18 : vector<8x32xf32>
    %cst_18 = arith.constant 5.000000e-01 : f32
    %21 = vector.broadcast %cst_18 : f32 to vector<8x32xf32>
    %22 = arith.addf %20, %21 : vector<8x32xf32>
    %23 = vector.extract_strided_slice %17 {offsets = [0, 32], sizes = [8, 32], strides = [1, 1]} : vector<8x128xf32> to vector<8x32xf32>
    %cst_19 = arith.constant 5.000000e-01 : f32
    %24 = vector.broadcast %cst_19 : f32 to vector<8x32xf32>
    %25 = arith.mulf %24, %23 : vector<8x32xf32>
    %cst_20 = arith.constant 5.000000e-01 : f32
    %26 = vector.broadcast %cst_20 : f32 to vector<8x32xf32>
    %27 = arith.addf %25, %26 : vector<8x32xf32>
    %28 = vector.extract_strided_slice %17 {offsets = [0, 64], sizes = [8, 32], strides = [1, 1]} : vector<8x128xf32> to vector<8x32xf32>
    %29 = vector.extract_strided_slice %17 {offsets = [0, 96], sizes = [8, 32], strides = [1, 1]} : vector<8x128xf32> to vector<8x32xf32>
    %cst_21 = arith.constant 5.000000e-01 : f32
    %30 = vector.broadcast %cst_21 : f32 to vector<8x32xf32>
    %31 = arith.mulf %30, %29 : vector<8x32xf32>
    %cst_22 = arith.constant 5.000000e-01 : f32
    %32 = vector.broadcast %cst_22 : f32 to vector<8x32xf32>
    %33 = arith.addf %31, %32 : vector<8x32xf32>
    %34 = arith.mulf %27, %12 : vector<8x32xf32>
    %35 = arith.mulf %22, %28 : vector<8x32xf32>
    %36 = arith.addf %34, %35 : vector<8x32xf32>
    %37 = math.tanh %36 : vector<8x32xf32>
    %38 = arith.mulf %33, %37 : vector<8x32xf32>
    %39 = arith.truncf %38 : vector<8x32xf32> to vector<8x32xbf16>
    %c0_23 = arith.constant 0 : index
    %c0_24 = arith.constant 0 : index
    %40 = vector.load %arg10[%c0_23, %c0_24] : memref<64x32xbf16, #tpu.memory_space<vmem>>, vector<8x32xbf16>
    tpu.vector_store %arg10[%c0_23, %c0_24], %39 {strides = array<i32>} : memref<64x32xbf16, #tpu.memory_space<vmem>>, vector<8x32xbf16>,
    %c8 = arith.constant 8 : index
    %c0_25 = arith.constant 0 : index
    %41 = vector.load %arg9[%c8, %c0_25] : memref<64x128xf32, #tpu.memory_space<vmem>>, vector<8x128xf32>
    %42 = arith.truncf %38 : vector<8x32xf32> to vector<8x32xbf16>
    %cst_26 = arith.constant dense<0.000000e+00> : vector<8x128xf32>
    %43 = tpu.matmul %42, %10, %cst_26 {dimension_numbers = #tpu.dot_dimension_numbers<[1], [0], [0], [1], [0, 0, 1, 1], [], []>} : vector<8x32xbf16>, vector<32x128xbf16>, vector<8x128xf32> -> vector<8x128xf32>
    %44 = arith.addf %41, %43 : vector<8x128xf32>
    %45 = math.tanh %44 : vector<8x128xf32>
    %46 = vector.extract_strided_slice %45 {offsets = [0, 0], sizes = [8, 32], strides = [1, 1]} : vector<8x128xf32> to vector<8x32xf32>
    %cst_27 = arith.constant 5.000000e-01 : f32
    %47 = vector.broadcast %cst_27 : f32 to vector<8x32xf32>
    %48 = arith.mulf %47, %46 : vector<8x32xf32>
    %cst_28 = arith.constant 5.000000e-01 : f32
    %49 = vector.broadcast %cst_28 : f32 to vector<8x32xf32>
    %50 = arith.addf %48, %49 : vector<8x32xf32>
    %51 = vector.extract_strided_slice %45 {offsets = [0, 32], sizes = [8, 32], strides = [1, 1]} : vector<8x128xf32> to vector<8x32xf32>
    %cst_29 = arith.constant 5.000000e-01 : f32
    %52 = vector.broadcast %cst_29 : f32 to vector<8x32xf32>
    %53 = arith.mulf %52, %51 : vector<8x32xf32>
    %cst_30 = arith.constant 5.000000e-01 : f32
    %54 = vector.broadcast %cst_30 : f32 to vector<8x32xf32>
    %55 = arith.addf %53, %54 : vector<8x32xf32>
    %56 = vector.extract_strided_slice %45 {offsets = [0, 64], sizes = [8, 32], strides = [1, 1]} : vector<8x128xf32> to vector<8x32xf32>
    %57 = vector.extract_strided_slice %45 {offsets = [0, 96], sizes = [8, 32], strides = [1, 1]} : vector<8x128xf32> to vector<8x32xf32>
    %cst_31 = arith.constant 5.000000e-01 : f32
    %58 = vector.broadcast %cst_31 : f32 to vector<8x32xf32>
    %59 = arith.mulf %58, %57 : vector<8x32xf32>
    %cst_32 = arith.constant 5.000000e-01 : f32
    %60 = vector.broadcast %cst_32 : f32 to vector<8x32xf32>
    %61 = arith.addf %59, %60 : vector<8x32xf32>
    %62 = arith.mulf %55, %36 : vector<8x32xf32>
    %63 = arith.mulf %50, %56 : vector<8x32xf32>
    %64 = arith.addf %62, %63 : vector<8x32xf32>
    %65 = math.tanh %64 : vector<8x32xf32>
    %66 = arith.mulf %61, %65 : vector<8x32xf32>
    %67 = arith.truncf %66 : vector<8x32xf32> to vector<8x32xbf16>
    %c8_33 = arith.constant 8 : index
    %c0_34 = arith.constant 0 : index
    %68 = vector.load %arg10[%c8_33, %c0_34] : memref<64x32xbf16, #tpu.memory_space<vmem>>, vector<8x32xbf16>
    tpu.vector_store %arg10[%c8_33, %c0_34], %67 {strides = array<i32>} : memref<64x32xbf16, #tpu.memory_space<vmem>>, vector<8x32xbf16>,
    %c16 = arith.constant 16 : index
    %c0_35 = arith.constant 0 : index
    %69 = vector.load %arg9[%c16, %c0_35] : memref<64x128xf32, #tpu.memory_space<vmem>>, vector<8x128xf32>
    %70 = arith.truncf %66 : vector<8x32xf32> to vector<8x32xbf16>
    %cst_36 = arith.constant dense<0.000000e+00> : vector<8x128xf32>
    %71 = tpu.matmul %70, %10, %cst_36 {dimension_numbers = #tpu.dot_dimension_numbers<[1], [0], [0], [1], [0, 0, 1, 1], [], []>} : vector<8x32xbf16>, vector<32x128xbf16>, vector<8x128xf32> -> vector<8x128xf32>
    %72 = arith.addf %69, %71 : vector<8x128xf32>
    %73 = math.tanh %72 : vector<8x128xf32>
    %74 = vector.extract_strided_slice %73 {offsets = [0, 0], sizes = [8, 32], strides = [1, 1]} : vector<8x128xf32> to vector<8x32xf32>
    %cst_37 = arith.constant 5.000000e-01 : f32
    %75 = vector.broadcast %cst_37 : f32 to vector<8x32xf32>
    %76 = arith.mulf %75, %74 : vector<8x32xf32>
    %cst_38 = arith.constant 5.000000e-01 : f32
    %77 = vector.broadcast %cst_38 : f32 to vector<8x32xf32>
    %78 = arith.addf %76, %77 : vector<8x32xf32>
    %79 = vector.extract_strided_slice %73 {offsets = [0, 32], sizes = [8, 32], strides = [1, 1]} : vector<8x128xf32> to vector<8x32xf32>
    %cst_39 = arith.constant 5.000000e-01 : f32
    %80 = vector.broadcast %cst_39 : f32 to vector<8x32xf32>
    %81 = arith.mulf %80, %79 : vector<8x32xf32>
    %cst_40 = arith.constant 5.000000e-01 : f32
    %82 = vector.broadcast %cst_40 : f32 to vector<8x32xf32>
    %83 = arith.addf %81, %82 : vector<8x32xf32>
    %84 = vector.extract_strided_slice %73 {offsets = [0, 64], sizes = [8, 32], strides = [1, 1]} : vector<8x128xf32> to vector<8x32xf32>
    %85 = vector.extract_strided_slice %73 {offsets = [0, 96], sizes = [8, 32], strides = [1, 1]} : vector<8x128xf32> to vector<8x32xf32>
    %cst_41 = arith.constant 5.000000e-01 : f32
    %86 = vector.broadcast %cst_41 : f32 to vector<8x32xf32>
    %87 = arith.mulf %86, %85 : vector<8x32xf32>
    %cst_42 = arith.constant 5.000000e-01 : f32
    %88 = vector.broadcast %cst_42 : f32 to vector<8x32xf32>
    %89 = arith.addf %87, %88 : vector<8x32xf32>
    %90 = arith.mulf %83, %64 : vector<8x32xf32>
    %91 = arith.mulf %78, %84 : vector<8x32xf32>
    %92 = arith.addf %90, %91 : vector<8x32xf32>
    %93 = math.tanh %92 : vector<8x32xf32>
    %94 = arith.mulf %89, %93 : vector<8x32xf32>
    %95 = arith.truncf %94 : vector<8x32xf32> to vector<8x32xbf16>
    %c16_43 = arith.constant 16 : index
    %c0_44 = arith.constant 0 : index
    %96 = vector.load %arg10[%c16_43, %c0_44] : memref<64x32xbf16, #tpu.memory_space<vmem>>, vector<8x32xbf16>
    tpu.vector_store %arg10[%c16_43, %c0_44], %95 {strides = array<i32>} : memref<64x32xbf16, #tpu.memory_space<vmem>>, vector<8x32xbf16>,
    %c24 = arith.constant 24 : index
    %c0_45 = arith.constant 0 : index
    %97 = vector.load %arg9[%c24, %c0_45] : memref<64x128xf32, #tpu.memory_space<vmem>>, vector<8x128xf32>
    %98 = arith.truncf %94 : vector<8x32xf32> to vector<8x32xbf16>
    %cst_46 = arith.constant dense<0.000000e+00> : vector<8x128xf32>
    %99 = tpu.matmul %98, %10, %cst_46 {dimension_numbers = #tpu.dot_dimension_numbers<[1], [0], [0], [1], [0, 0, 1, 1], [], []>} : vector<8x32xbf16>, vector<32x128xbf16>, vector<8x128xf32> -> vector<8x128xf32>
    %100 = arith.addf %97, %99 : vector<8x128xf32>
    %101 = math.tanh %100 : vector<8x128xf32>
    %102 = vector.extract_strided_slice %101 {offsets = [0, 0], sizes = [8, 32], strides = [1, 1]} : vector<8x128xf32> to vector<8x32xf32>
    %cst_47 = arith.constant 5.000000e-01 : f32
    %103 = vector.broadcast %cst_47 : f32 to vector<8x32xf32>
    %104 = arith.mulf %103, %102 : vector<8x32xf32>
    %cst_48 = arith.constant 5.000000e-01 : f32
    %105 = vector.broadcast %cst_48 : f32 to vector<8x32xf32>
    %106 = arith.addf %104, %105 : vector<8x32xf32>
    %107 = vector.extract_strided_slice %101 {offsets = [0, 32], sizes = [8, 32], strides = [1, 1]} : vector<8x128xf32> to vector<8x32xf32>
    %cst_49 = arith.constant 5.000000e-01 : f32
    %108 = vector.broadcast %cst_49 : f32 to vector<8x32xf32>
    %109 = arith.mulf %108, %107 : vector<8x32xf32>
    %cst_50 = arith.constant 5.000000e-01 : f32
    %110 = vector.broadcast %cst_50 : f32 to vector<8x32xf32>
    %111 = arith.addf %109, %110 : vector<8x32xf32>
    %112 = vector.extract_strided_slice %101 {offsets = [0, 64], sizes = [8, 32], strides = [1, 1]} : vector<8x128xf32> to vector<8x32xf32>
    %113 = vector.extract_strided_slice %101 {offsets = [0, 96], sizes = [8, 32], strides = [1, 1]} : vector<8x128xf32> to vector<8x32xf32>
    %cst_51 = arith.constant 5.000000e-01 : f32
    %114 = vector.broadcast %cst_51 : f32 to vector<8x32xf32>
    %115 = arith.mulf %114, %113 : vector<8x32xf32>
    %cst_52 = arith.constant 5.000000e-01 : f32
    %116 = vector.broadcast %cst_52 : f32 to vector<8x32xf32>
    %117 = arith.addf %115, %116 : vector<8x32xf32>
    %118 = arith.mulf %111, %92 : vector<8x32xf32>
    %119 = arith.mulf %106, %112 : vector<8x32xf32>
    %120 = arith.addf %118, %119 : vector<8x32xf32>
    %121 = math.tanh %120 : vector<8x32xf32>
    %122 = arith.mulf %117, %121 : vector<8x32xf32>
    %123 = arith.truncf %122 : vector<8x32xf32> to vector<8x32xbf16>
    %c24_53 = arith.constant 24 : index
    %c0_54 = arith.constant 0 : index
    %124 = vector.load %arg10[%c24_53, %c0_54] : memref<64x32xbf16, #tpu.memory_space<vmem>>, vector<8x32xbf16>
    tpu.vector_store %arg10[%c24_53, %c0_54], %123 {strides = array<i32>} : memref<64x32xbf16, #tpu.memory_space<vmem>>, vector<8x32xbf16>,
    %c32 = arith.constant 32 : index
    %c0_55 = arith.constant 0 : index
    %125 = vector.load %arg9[%c32, %c0_55] : memref<64x128xf32, #tpu.memory_space<vmem>>, vector<8x128xf32>
    %126 = arith.truncf %122 : vector<8x32xf32> to vector<8x32xbf16>
    %cst_56 = arith.constant dense<0.000000e+00> : vector<8x128xf32>
    %127 = tpu.matmul %126, %10, %cst_56 {dimension_numbers = #tpu.dot_dimension_numbers<[1], [0], [0], [1], [0, 0, 1, 1], [], []>} : vector<8x32xbf16>, vector<32x128xbf16>, vector<8x128xf32> -> vector<8x128xf32>
    %128 = arith.addf %125, %127 : vector<8x128xf32>
    %129 = math.tanh %128 : vector<8x128xf32>
    %130 = vector.extract_strided_slice %129 {offsets = [0, 0], sizes = [8, 32], strides = [1, 1]} : vector<8x128xf32> to vector<8x32xf32>
    %cst_57 = arith.constant 5.000000e-01 : f32
    %131 = vector.broadcast %cst_57 : f32 to vector<8x32xf32>
    %132 = arith.mulf %131, %130 : vector<8x32xf32>
    %cst_58 = arith.constant 5.000000e-01 : f32
    %133 = vector.broadcast %cst_58 : f32 to vector<8x32xf32>
    %134 = arith.addf %132, %133 : vector<8x32xf32>
    %135 = vector.extract_strided_slice %129 {offsets = [0, 32], sizes = [8, 32], strides = [1, 1]} : vector<8x128xf32> to vector<8x32xf32>
    %cst_59 = arith.constant 5.000000e-01 : f32
    %136 = vector.broadcast %cst_59 : f32 to vector<8x32xf32>
    %137 = arith.mulf %136, %135 : vector<8x32xf32>
    %cst_60 = arith.constant 5.000000e-01 : f32
    %138 = vector.broadcast %cst_60 : f32 to vector<8x32xf32>
    %139 = arith.addf %137, %138 : vector<8x32xf32>
    %140 = vector.extract_strided_slice %129 {offsets = [0, 64], sizes = [8, 32], strides = [1, 1]} : vector<8x128xf32> to vector<8x32xf32>
    %141 = vector.extract_strided_slice %129 {offsets = [0, 96], sizes = [8, 32], strides = [1, 1]} : vector<8x128xf32> to vector<8x32xf32>
    %cst_61 = arith.constant 5.000000e-01 : f32
    %142 = vector.broadcast %cst_61 : f32 to vector<8x32xf32>
    %143 = arith.mulf %142, %141 : vector<8x32xf32>
    %cst_62 = arith.constant 5.000000e-01 : f32
    %144 = vector.broadcast %cst_62 : f32 to vector<8x32xf32>
    %145 = arith.addf %143, %144 : vector<8x32xf32>
    %146 = arith.mulf %139, %120 : vector<8x32xf32>
    %147 = arith.mulf %134, %140 : vector<8x32xf32>
    %148 = arith.addf %146, %147 : vector<8x32xf32>
    %149 = math.tanh %148 : vector<8x32xf32>
    %150 = arith.mulf %145, %149 : vector<8x32xf32>
    %151 = arith.truncf %150 : vector<8x32xf32> to vector<8x32xbf16>
    %c32_63 = arith.constant 32 : index
    %c0_64 = arith.constant 0 : index
    %152 = vector.load %arg10[%c32_63, %c0_64] : memref<64x32xbf16, #tpu.memory_space<vmem>>, vector<8x32xbf16>
    tpu.vector_store %arg10[%c32_63, %c0_64], %151 {strides = array<i32>} : memref<64x32xbf16, #tpu.memory_space<vmem>>, vector<8x32xbf16>,
    %c40 = arith.constant 40 : index
    %c0_65 = arith.constant 0 : index
    %153 = vector.load %arg9[%c40, %c0_65] : memref<64x128xf32, #tpu.memory_space<vmem>>, vector<8x128xf32>
    %154 = arith.truncf %150 : vector<8x32xf32> to vector<8x32xbf16>
    %cst_66 = arith.constant dense<0.000000e+00> : vector<8x128xf32>
    %155 = tpu.matmul %154, %10, %cst_66 {dimension_numbers = #tpu.dot_dimension_numbers<[1], [0], [0], [1], [0, 0, 1, 1], [], []>} : vector<8x32xbf16>, vector<32x128xbf16>, vector<8x128xf32> -> vector<8x128xf32>
    %156 = arith.addf %153, %155 : vector<8x128xf32>
    %157 = math.tanh %156 : vector<8x128xf32>
    %158 = vector.extract_strided_slice %157 {offsets = [0, 0], sizes = [8, 32], strides = [1, 1]} : vector<8x128xf32> to vector<8x32xf32>
    %cst_67 = arith.constant 5.000000e-01 : f32
    %159 = vector.broadcast %cst_67 : f32 to vector<8x32xf32>
    %160 = arith.mulf %159, %158 : vector<8x32xf32>
    %cst_68 = arith.constant 5.000000e-01 : f32
    %161 = vector.broadcast %cst_68 : f32 to vector<8x32xf32>
    %162 = arith.addf %160, %161 : vector<8x32xf32>
    %163 = vector.extract_strided_slice %157 {offsets = [0, 32], sizes = [8, 32], strides = [1, 1]} : vector<8x128xf32> to vector<8x32xf32>
    %cst_69 = arith.constant 5.000000e-01 : f32
    %164 = vector.broadcast %cst_69 : f32 to vector<8x32xf32>
    %165 = arith.mulf %164, %163 : vector<8x32xf32>
    %cst_70 = arith.constant 5.000000e-01 : f32
    %166 = vector.broadcast %cst_70 : f32 to vector<8x32xf32>
    %167 = arith.addf %165, %166 : vector<8x32xf32>
    %168 = vector.extract_strided_slice %157 {offsets = [0, 64], sizes = [8, 32], strides = [1, 1]} : vector<8x128xf32> to vector<8x32xf32>
    %169 = vector.extract_strided_slice %157 {offsets = [0, 96], sizes = [8, 32], strides = [1, 1]} : vector<8x128xf32> to vector<8x32xf32>
    %cst_71 = arith.constant 5.000000e-01 : f32
    %170 = vector.broadcast %cst_71 : f32 to vector<8x32xf32>
    %171 = arith.mulf %170, %169 : vector<8x32xf32>
    %cst_72 = arith.constant 5.000000e-01 : f32
    %172 = vector.broadcast %cst_72 : f32 to vector<8x32xf32>
    %173 = arith.addf %171, %172 : vector<8x32xf32>
    %174 = arith.mulf %167, %148 : vector<8x32xf32>
    %175 = arith.mulf %162, %168 : vector<8x32xf32>
    %176 = arith.addf %174, %175 : vector<8x32xf32>
    %177 = math.tanh %176 : vector<8x32xf32>
    %178 = arith.mulf %173, %177 : vector<8x32xf32>
    %179 = arith.truncf %178 : vector<8x32xf32> to vector<8x32xbf16>
    %c40_73 = arith.constant 40 : index
    %c0_74 = arith.constant 0 : index
    %180 = vector.load %arg10[%c40_73, %c0_74] : memref<64x32xbf16, #tpu.memory_space<vmem>>, vector<8x32xbf16>
    tpu.vector_store %arg10[%c40_73, %c0_74], %179 {strides = array<i32>} : memref<64x32xbf16, #tpu.memory_space<vmem>>, vector<8x32xbf16>,
    %c48 = arith.constant 48 : index
    %c0_75 = arith.constant 0 : index
    %181 = vector.load %arg9[%c48, %c0_75] : memref<64x128xf32, #tpu.memory_space<vmem>>, vector<8x128xf32>
    %182 = arith.truncf %178 : vector<8x32xf32> to vector<8x32xbf16>
    %cst_76 = arith.constant dense<0.000000e+00> : vector<8x128xf32>
    %183 = tpu.matmul %182, %10, %cst_76 {dimension_numbers = #tpu.dot_dimension_numbers<[1], [0], [0], [1], [0, 0, 1, 1], [], []>} : vector<8x32xbf16>, vector<32x128xbf16>, vector<8x128xf32> -> vector<8x128xf32>
    %184 = arith.addf %181, %183 : vector<8x128xf32>
    %185 = math.tanh %184 : vector<8x128xf32>
    %186 = vector.extract_strided_slice %185 {offsets = [0, 0], sizes = [8, 32], strides = [1, 1]} : vector<8x128xf32> to vector<8x32xf32>
    %cst_77 = arith.constant 5.000000e-01 : f32
    %187 = vector.broadcast %cst_77 : f32 to vector<8x32xf32>
    %188 = arith.mulf %187, %186 : vector<8x32xf32>
    %cst_78 = arith.constant 5.000000e-01 : f32
    %189 = vector.broadcast %cst_78 : f32 to vector<8x32xf32>
    %190 = arith.addf %188, %189 : vector<8x32xf32>
    %191 = vector.extract_strided_slice %185 {offsets = [0, 32], sizes = [8, 32], strides = [1, 1]} : vector<8x128xf32> to vector<8x32xf32>
    %cst_79 = arith.constant 5.000000e-01 : f32
    %192 = vector.broadcast %cst_79 : f32 to vector<8x32xf32>
    %193 = arith.mulf %192, %191 : vector<8x32xf32>
    %cst_80 = arith.constant 5.000000e-01 : f32
    %194 = vector.broadcast %cst_80 : f32 to vector<8x32xf32>
    %195 = arith.addf %193, %194 : vector<8x32xf32>
    %196 = vector.extract_strided_slice %185 {offsets = [0, 64], sizes = [8, 32], strides = [1, 1]} : vector<8x128xf32> to vector<8x32xf32>
    %197 = vector.extract_strided_slice %185 {offsets = [0, 96], sizes = [8, 32], strides = [1, 1]} : vector<8x128xf32> to vector<8x32xf32>
    %cst_81 = arith.constant 5.000000e-01 : f32
    %198 = vector.broadcast %cst_81 : f32 to vector<8x32xf32>
    %199 = arith.mulf %198, %197 : vector<8x32xf32>
    %cst_82 = arith.constant 5.000000e-01 : f32
    %200 = vector.broadcast %cst_82 : f32 to vector<8x32xf32>
    %201 = arith.addf %199, %200 : vector<8x32xf32>
    %202 = arith.mulf %195, %176 : vector<8x32xf32>
    %203 = arith.mulf %190, %196 : vector<8x32xf32>
    %204 = arith.addf %202, %203 : vector<8x32xf32>
    %205 = math.tanh %204 : vector<8x32xf32>
    %206 = arith.mulf %201, %205 : vector<8x32xf32>
    %207 = arith.truncf %206 : vector<8x32xf32> to vector<8x32xbf16>
    %c48_83 = arith.constant 48 : index
    %c0_84 = arith.constant 0 : index
    %208 = vector.load %arg10[%c48_83, %c0_84] : memref<64x32xbf16, #tpu.memory_space<vmem>>, vector<8x32xbf16>
    tpu.vector_store %arg10[%c48_83, %c0_84], %207 {strides = array<i32>} : memref<64x32xbf16, #tpu.memory_space<vmem>>, vector<8x32xbf16>,
    %c56 = arith.constant 56 : index
    %c0_85 = arith.constant 0 : index
    %209 = vector.load %arg9[%c56, %c0_85] : memref<64x128xf32, #tpu.memory_space<vmem>>, vector<8x128xf32>
    %210 = arith.truncf %206 : vector<8x32xf32> to vector<8x32xbf16>
    %cst_86 = arith.constant dense<0.000000e+00> : vector<8x128xf32>
    %211 = tpu.matmul %210, %10, %cst_86 {dimension_numbers = #tpu.dot_dimension_numbers<[1], [0], [0], [1], [0, 0, 1, 1], [], []>} : vector<8x32xbf16>, vector<32x128xbf16>, vector<8x128xf32> -> vector<8x128xf32>
    %212 = arith.addf %209, %211 : vector<8x128xf32>
    %213 = math.tanh %212 : vector<8x128xf32>
    %214 = vector.extract_strided_slice %213 {offsets = [0, 0], sizes = [8, 32], strides = [1, 1]} : vector<8x128xf32> to vector<8x32xf32>
    %cst_87 = arith.constant 5.000000e-01 : f32
    %215 = vector.broadcast %cst_87 : f32 to vector<8x32xf32>
    %216 = arith.mulf %215, %214 : vector<8x32xf32>
    %cst_88 = arith.constant 5.000000e-01 : f32
    %217 = vector.broadcast %cst_88 : f32 to vector<8x32xf32>
    %218 = arith.addf %216, %217 : vector<8x32xf32>
    %219 = vector.extract_strided_slice %213 {offsets = [0, 32], sizes = [8, 32], strides = [1, 1]} : vector<8x128xf32> to vector<8x32xf32>
    %cst_89 = arith.constant 5.000000e-01 : f32
    %220 = vector.broadcast %cst_89 : f32 to vector<8x32xf32>
    %221 = arith.mulf %220, %219 : vector<8x32xf32>
    %cst_90 = arith.constant 5.000000e-01 : f32
    %222 = vector.broadcast %cst_90 : f32 to vector<8x32xf32>
    %223 = arith.addf %221, %222 : vector<8x32xf32>
    %224 = vector.extract_strided_slice %213 {offsets = [0, 64], sizes = [8, 32], strides = [1, 1]} : vector<8x128xf32> to vector<8x32xf32>
    %225 = vector.extract_strided_slice %213 {offsets = [0, 96], sizes = [8, 32], strides = [1, 1]} : vector<8x128xf32> to vector<8x32xf32>
    %cst_91 = arith.constant 5.000000e-01 : f32
    %226 = vector.broadcast %cst_91 : f32 to vector<8x32xf32>
    %227 = arith.mulf %226, %225 : vector<8x32xf32>
    %cst_92 = arith.constant 5.000000e-01 : f32
    %228 = vector.broadcast %cst_92 : f32 to vector<8x32xf32>
    %229 = arith.addf %227, %228 : vector<8x32xf32>
    %230 = arith.mulf %223, %204 : vector<8x32xf32>
    %231 = arith.mulf %218, %224 : vector<8x32xf32>
    %232 = arith.addf %230, %231 : vector<8x32xf32>
    %233 = math.tanh %232 : vector<8x32xf32>
    %234 = arith.mulf %229, %233 : vector<8x32xf32>
    %235 = arith.truncf %234 : vector<8x32xf32> to vector<8x32xbf16>
    %c56_93 = arith.constant 56 : index
    %c0_94 = arith.constant 0 : index
    %236 = vector.load %arg10[%c56_93, %c0_94] : memref<64x32xbf16, #tpu.memory_space<vmem>>, vector<8x32xbf16>
    tpu.vector_store %arg10[%c56_93, %c0_94], %235 {strides = array<i32>} : memref<64x32xbf16, #tpu.memory_space<vmem>>, vector<8x32xbf16>,
    %c0_95 = arith.constant 0 : index
    %c0_96 = arith.constant 0 : index
    %237 = vector.load %arg10[%c0_95, %c0_96] : memref<64x32xbf16, #tpu.memory_space<vmem>>, vector<64x32xbf16>
    %c0_97 = arith.constant 0 : index
    %c0_98 = arith.constant 0 : index
    %c0_99 = arith.constant 0 : index
    %238 = vector.load %arg3[%c0_97, %c0_98, %c0_99] : memref<1x32x128xbf16, #tpu.memory_space<vmem>>, vector<1x32x128xbf16>
    %239 = vector.shape_cast %238 : vector<1x32x128xbf16> to vector<32x128xbf16>
    %cst_100 = arith.constant dense<0.000000e+00> : vector<64x128xf32>
    %240 = tpu.matmul %237, %239, %cst_100 {dimension_numbers = #tpu.dot_dimension_numbers<[1], [0], [0], [1], [0, 0, 1, 1], [], []>} : vector<64x32xbf16>, vector<32x128xbf16>, vector<64x128xf32> -> vector<64x128xf32>
    %c1 = arith.constant 1 : index
    %c0_101 = arith.constant 0 : index
    %c0_102 = arith.constant 0 : index
    %241 = vector.load %arg5[%c1, %c0_101, %c0_102] : memref<2x1x128xf32, #tpu.memory_space<vmem>>, vector<1x1x128xf32>
    %242 = vector.shape_cast %241 : vector<1x1x128xf32> to vector<1x128xf32>
    %243 = vector.broadcast %242 : vector<1x128xf32> to vector<64x128xf32>
    %244 = arith.addf %240, %243 : vector<64x128xf32>
    %c0_103 = arith.constant 0 : index
    %c0_104 = arith.constant 0 : index
    %245 = vector.load %arg9[%c0_103, %c0_104] : memref<64x128xf32, #tpu.memory_space<vmem>>, vector<64x128xf32>
    tpu.vector_store %arg9[%c0_103, %c0_104], %244 {strides = array<i32>} : memref<64x128xf32, #tpu.memory_space<vmem>>, vector<64x128xf32>,
    %c1_105 = arith.constant 1 : index
    %c0_106 = arith.constant 0 : index
    %c0_107 = arith.constant 0 : index
    %246 = vector.load %arg4[%c1_105, %c0_106, %c0_107] : memref<2x32x128xbf16, #tpu.memory_space<vmem>>, vector<1x32x128xbf16>
    %247 = vector.shape_cast %246 : vector<1x32x128xbf16> to vector<32x128xbf16>
    %cst_108 = arith.constant 0.000000e+00 : f32
    %248 = vector.broadcast %cst_108 : f32 to vector<8x32xf32>
    %cst_109 = arith.constant 0.000000e+00 : f32
    %249 = vector.broadcast %cst_109 : f32 to vector<8x32xf32>
    %c0_110 = arith.constant 0 : index
    %c0_111 = arith.constant 0 : index
    %250 = vector.load %arg9[%c0_110, %c0_111] : memref<64x128xf32, #tpu.memory_space<vmem>>, vector<8x128xf32>
    %251 = arith.truncf %248 : vector<8x32xf32> to vector<8x32xbf16>
    %cst_112 = arith.constant dense<0.000000e+00> : vector<8x128xf32>
    %252 = tpu.matmul %251, %247, %cst_112 {dimension_numbers = #tpu.dot_dimension_numbers<[1], [0], [0], [1], [0, 0, 1, 1], [], []>} : vector<8x32xbf16>, vector<32x128xbf16>, vector<8x128xf32> -> vector<8x128xf32>
    %253 = arith.addf %250, %252 : vector<8x128xf32>
    %254 = math.tanh %253 : vector<8x128xf32>
    %255 = vector.extract_strided_slice %254 {offsets = [0, 0], sizes = [8, 32], strides = [1, 1]} : vector<8x128xf32> to vector<8x32xf32>
    %cst_113 = arith.constant 5.000000e-01 : f32
    %256 = vector.broadcast %cst_113 : f32 to vector<8x32xf32>
    %257 = arith.mulf %256, %255 : vector<8x32xf32>
    %cst_114 = arith.constant 5.000000e-01 : f32
    %258 = vector.broadcast %cst_114 : f32 to vector<8x32xf32>
    %259 = arith.addf %257, %258 : vector<8x32xf32>
    %260 = vector.extract_strided_slice %254 {offsets = [0, 32], sizes = [8, 32], strides = [1, 1]} : vector<8x128xf32> to vector<8x32xf32>
    %cst_115 = arith.constant 5.000000e-01 : f32
    %261 = vector.broadcast %cst_115 : f32 to vector<8x32xf32>
    %262 = arith.mulf %261, %260 : vector<8x32xf32>
    %cst_116 = arith.constant 5.000000e-01 : f32
    %263 = vector.broadcast %cst_116 : f32 to vector<8x32xf32>
    %264 = arith.addf %262, %263 : vector<8x32xf32>
    %265 = vector.extract_strided_slice %254 {offsets = [0, 64], sizes = [8, 32], strides = [1, 1]} : vector<8x128xf32> to vector<8x32xf32>
    %266 = vector.extract_strided_slice %254 {offsets = [0, 96], sizes = [8, 32], strides = [1, 1]} : vector<8x128xf32> to vector<8x32xf32>
    %cst_117 = arith.constant 5.000000e-01 : f32
    %267 = vector.broadcast %cst_117 : f32 to vector<8x32xf32>
    %268 = arith.mulf %267, %266 : vector<8x32xf32>
    %cst_118 = arith.constant 5.000000e-01 : f32
    %269 = vector.broadcast %cst_118 : f32 to vector<8x32xf32>
    %270 = arith.addf %268, %269 : vector<8x32xf32>
    %271 = arith.mulf %264, %249 : vector<8x32xf32>
    %272 = arith.mulf %259, %265 : vector<8x32xf32>
    %273 = arith.addf %271, %272 : vector<8x32xf32>
    %274 = math.tanh %273 : vector<8x32xf32>
    %275 = arith.mulf %270, %274 : vector<8x32xf32>
    %c8_119 = arith.constant 8 : index
    %c0_120 = arith.constant 0 : index
    %276 = vector.load %arg9[%c8_119, %c0_120] : memref<64x128xf32, #tpu.memory_space<vmem>>, vector<8x128xf32>
    %277 = arith.truncf %275 : vector<8x32xf32> to vector<8x32xbf16>
    %cst_121 = arith.constant dense<0.000000e+00> : vector<8x128xf32>
    %278 = tpu.matmul %277, %247, %cst_121 {dimension_numbers = #tpu.dot_dimension_numbers<[1], [0], [0], [1], [0, 0, 1, 1], [], []>} : vector<8x32xbf16>, vector<32x128xbf16>, vector<8x128xf32> -> vector<8x128xf32>
    %279 = arith.addf %276, %278 : vector<8x128xf32>
    %280 = math.tanh %279 : vector<8x128xf32>
    %281 = vector.extract_strided_slice %280 {offsets = [0, 0], sizes = [8, 32], strides = [1, 1]} : vector<8x128xf32> to vector<8x32xf32>
    %cst_122 = arith.constant 5.000000e-01 : f32
    %282 = vector.broadcast %cst_122 : f32 to vector<8x32xf32>
    %283 = arith.mulf %282, %281 : vector<8x32xf32>
    %cst_123 = arith.constant 5.000000e-01 : f32
    %284 = vector.broadcast %cst_123 : f32 to vector<8x32xf32>
    %285 = arith.addf %283, %284 : vector<8x32xf32>
    %286 = vector.extract_strided_slice %280 {offsets = [0, 32], sizes = [8, 32], strides = [1, 1]} : vector<8x128xf32> to vector<8x32xf32>
    %cst_124 = arith.constant 5.000000e-01 : f32
    %287 = vector.broadcast %cst_124 : f32 to vector<8x32xf32>
    %288 = arith.mulf %287, %286 : vector<8x32xf32>
    %cst_125 = arith.constant 5.000000e-01 : f32
    %289 = vector.broadcast %cst_125 : f32 to vector<8x32xf32>
    %290 = arith.addf %288, %289 : vector<8x32xf32>
    %291 = vector.extract_strided_slice %280 {offsets = [0, 64], sizes = [8, 32], strides = [1, 1]} : vector<8x128xf32> to vector<8x32xf32>
    %292 = vector.extract_strided_slice %280 {offsets = [0, 96], sizes = [8, 32], strides = [1, 1]} : vector<8x128xf32> to vector<8x32xf32>
    %cst_126 = arith.constant 5.000000e-01 : f32
    %293 = vector.broadcast %cst_126 : f32 to vector<8x32xf32>
    %294 = arith.mulf %293, %292 : vector<8x32xf32>
    %cst_127 = arith.constant 5.000000e-01 : f32
    %295 = vector.broadcast %cst_127 : f32 to vector<8x32xf32>
    %296 = arith.addf %294, %295 : vector<8x32xf32>
    %297 = arith.mulf %290, %273 : vector<8x32xf32>
    %298 = arith.mulf %285, %291 : vector<8x32xf32>
    %299 = arith.addf %297, %298 : vector<8x32xf32>
    %300 = math.tanh %299 : vector<8x32xf32>
    %301 = arith.mulf %296, %300 : vector<8x32xf32>
    %c16_128 = arith.constant 16 : index
    %c0_129 = arith.constant 0 : index
    %302 = vector.load %arg9[%c16_128, %c0_129] : memref<64x128xf32, #tpu.memory_space<vmem>>, vector<8x128xf32>
    %303 = arith.truncf %301 : vector<8x32xf32> to vector<8x32xbf16>
    %cst_130 = arith.constant dense<0.000000e+00> : vector<8x128xf32>
    %304 = tpu.matmul %303, %247, %cst_130 {dimension_numbers = #tpu.dot_dimension_numbers<[1], [0], [0], [1], [0, 0, 1, 1], [], []>} : vector<8x32xbf16>, vector<32x128xbf16>, vector<8x128xf32> -> vector<8x128xf32>
    %305 = arith.addf %302, %304 : vector<8x128xf32>
    %306 = math.tanh %305 : vector<8x128xf32>
    %307 = vector.extract_strided_slice %306 {offsets = [0, 0], sizes = [8, 32], strides = [1, 1]} : vector<8x128xf32> to vector<8x32xf32>
    %cst_131 = arith.constant 5.000000e-01 : f32
    %308 = vector.broadcast %cst_131 : f32 to vector<8x32xf32>
    %309 = arith.mulf %308, %307 : vector<8x32xf32>
    %cst_132 = arith.constant 5.000000e-01 : f32
    %310 = vector.broadcast %cst_132 : f32 to vector<8x32xf32>
    %311 = arith.addf %309, %310 : vector<8x32xf32>
    %312 = vector.extract_strided_slice %306 {offsets = [0, 32], sizes = [8, 32], strides = [1, 1]} : vector<8x128xf32> to vector<8x32xf32>
    %cst_133 = arith.constant 5.000000e-01 : f32
    %313 = vector.broadcast %cst_133 : f32 to vector<8x32xf32>
    %314 = arith.mulf %313, %312 : vector<8x32xf32>
    %cst_134 = arith.constant 5.000000e-01 : f32
    %315 = vector.broadcast %cst_134 : f32 to vector<8x32xf32>
    %316 = arith.addf %314, %315 : vector<8x32xf32>
    %317 = vector.extract_strided_slice %306 {offsets = [0, 64], sizes = [8, 32], strides = [1, 1]} : vector<8x128xf32> to vector<8x32xf32>
    %318 = vector.extract_strided_slice %306 {offsets = [0, 96], sizes = [8, 32], strides = [1, 1]} : vector<8x128xf32> to vector<8x32xf32>
    %cst_135 = arith.constant 5.000000e-01 : f32
    %319 = vector.broadcast %cst_135 : f32 to vector<8x32xf32>
    %320 = arith.mulf %319, %318 : vector<8x32xf32>
    %cst_136 = arith.constant 5.000000e-01 : f32
    %321 = vector.broadcast %cst_136 : f32 to vector<8x32xf32>
    %322 = arith.addf %320, %321 : vector<8x32xf32>
    %323 = arith.mulf %316, %299 : vector<8x32xf32>
    %324 = arith.mulf %311, %317 : vector<8x32xf32>
    %325 = arith.addf %323, %324 : vector<8x32xf32>
    %326 = math.tanh %325 : vector<8x32xf32>
    %327 = arith.mulf %322, %326 : vector<8x32xf32>
    %c24_137 = arith.constant 24 : index
    %c0_138 = arith.constant 0 : index
    %328 = vector.load %arg9[%c24_137, %c0_138] : memref<64x128xf32, #tpu.memory_space<vmem>>, vector<8x128xf32>
    %329 = arith.truncf %327 : vector<8x32xf32> to vector<8x32xbf16>
    %cst_139 = arith.constant dense<0.000000e+00> : vector<8x128xf32>
    %330 = tpu.matmul %329, %247, %cst_139 {dimension_numbers = #tpu.dot_dimension_numbers<[1], [0], [0], [1], [0, 0, 1, 1], [], []>} : vector<8x32xbf16>, vector<32x128xbf16>, vector<8x128xf32> -> vector<8x128xf32>
    %331 = arith.addf %328, %330 : vector<8x128xf32>
    %332 = math.tanh %331 : vector<8x128xf32>
    %333 = vector.extract_strided_slice %332 {offsets = [0, 0], sizes = [8, 32], strides = [1, 1]} : vector<8x128xf32> to vector<8x32xf32>
    %cst_140 = arith.constant 5.000000e-01 : f32
    %334 = vector.broadcast %cst_140 : f32 to vector<8x32xf32>
    %335 = arith.mulf %334, %333 : vector<8x32xf32>
    %cst_141 = arith.constant 5.000000e-01 : f32
    %336 = vector.broadcast %cst_141 : f32 to vector<8x32xf32>
    %337 = arith.addf %335, %336 : vector<8x32xf32>
    %338 = vector.extract_strided_slice %332 {offsets = [0, 32], sizes = [8, 32], strides = [1, 1]} : vector<8x128xf32> to vector<8x32xf32>
    %cst_142 = arith.constant 5.000000e-01 : f32
    %339 = vector.broadcast %cst_142 : f32 to vector<8x32xf32>
    %340 = arith.mulf %339, %338 : vector<8x32xf32>
    %cst_143 = arith.constant 5.000000e-01 : f32
    %341 = vector.broadcast %cst_143 : f32 to vector<8x32xf32>
    %342 = arith.addf %340, %341 : vector<8x32xf32>
    %343 = vector.extract_strided_slice %332 {offsets = [0, 64], sizes = [8, 32], strides = [1, 1]} : vector<8x128xf32> to vector<8x32xf32>
    %344 = vector.extract_strided_slice %332 {offsets = [0, 96], sizes = [8, 32], strides = [1, 1]} : vector<8x128xf32> to vector<8x32xf32>
    %cst_144 = arith.constant 5.000000e-01 : f32
    %345 = vector.broadcast %cst_144 : f32 to vector<8x32xf32>
    %346 = arith.mulf %345, %344 : vector<8x32xf32>
    %cst_145 = arith.constant 5.000000e-01 : f32
    %347 = vector.broadcast %cst_145 : f32 to vector<8x32xf32>
    %348 = arith.addf %346, %347 : vector<8x32xf32>
    %349 = arith.mulf %342, %325 : vector<8x32xf32>
    %350 = arith.mulf %337, %343 : vector<8x32xf32>
    %351 = arith.addf %349, %350 : vector<8x32xf32>
    %352 = math.tanh %351 : vector<8x32xf32>
    %353 = arith.mulf %348, %352 : vector<8x32xf32>
    %c32_146 = arith.constant 32 : index
    %c0_147 = arith.constant 0 : index
    %354 = vector.load %arg9[%c32_146, %c0_147] : memref<64x128xf32, #tpu.memory_space<vmem>>, vector<8x128xf32>
    %355 = arith.truncf %353 : vector<8x32xf32> to vector<8x32xbf16>
    %cst_148 = arith.constant dense<0.000000e+00> : vector<8x128xf32>
    %356 = tpu.matmul %355, %247, %cst_148 {dimension_numbers = #tpu.dot_dimension_numbers<[1], [0], [0], [1], [0, 0, 1, 1], [], []>} : vector<8x32xbf16>, vector<32x128xbf16>, vector<8x128xf32> -> vector<8x128xf32>
    %357 = arith.addf %354, %356 : vector<8x128xf32>
    %358 = math.tanh %357 : vector<8x128xf32>
    %359 = vector.extract_strided_slice %358 {offsets = [0, 0], sizes = [8, 32], strides = [1, 1]} : vector<8x128xf32> to vector<8x32xf32>
    %cst_149 = arith.constant 5.000000e-01 : f32
    %360 = vector.broadcast %cst_149 : f32 to vector<8x32xf32>
    %361 = arith.mulf %360, %359 : vector<8x32xf32>
    %cst_150 = arith.constant 5.000000e-01 : f32
    %362 = vector.broadcast %cst_150 : f32 to vector<8x32xf32>
    %363 = arith.addf %361, %362 : vector<8x32xf32>
    %364 = vector.extract_strided_slice %358 {offsets = [0, 32], sizes = [8, 32], strides = [1, 1]} : vector<8x128xf32> to vector<8x32xf32>
    %cst_151 = arith.constant 5.000000e-01 : f32
    %365 = vector.broadcast %cst_151 : f32 to vector<8x32xf32>
    %366 = arith.mulf %365, %364 : vector<8x32xf32>
    %cst_152 = arith.constant 5.000000e-01 : f32
    %367 = vector.broadcast %cst_152 : f32 to vector<8x32xf32>
    %368 = arith.addf %366, %367 : vector<8x32xf32>
    %369 = vector.extract_strided_slice %358 {offsets = [0, 64], sizes = [8, 32], strides = [1, 1]} : vector<8x128xf32> to vector<8x32xf32>
    %370 = vector.extract_strided_slice %358 {offsets = [0, 96], sizes = [8, 32], strides = [1, 1]} : vector<8x128xf32> to vector<8x32xf32>
    %cst_153 = arith.constant 5.000000e-01 : f32
    %371 = vector.broadcast %cst_153 : f32 to vector<8x32xf32>
    %372 = arith.mulf %371, %370 : vector<8x32xf32>
    %cst_154 = arith.constant 5.000000e-01 : f32
    %373 = vector.broadcast %cst_154 : f32 to vector<8x32xf32>
    %374 = arith.addf %372, %373 : vector<8x32xf32>
    %375 = arith.mulf %368, %351 : vector<8x32xf32>
    %376 = arith.mulf %363, %369 : vector<8x32xf32>
    %377 = arith.addf %375, %376 : vector<8x32xf32>
    %378 = math.tanh %377 : vector<8x32xf32>
    %379 = arith.mulf %374, %378 : vector<8x32xf32>
    %c40_155 = arith.constant 40 : index
    %c0_156 = arith.constant 0 : index
    %380 = vector.load %arg9[%c40_155, %c0_156] : memref<64x128xf32, #tpu.memory_space<vmem>>, vector<8x128xf32>
    %381 = arith.truncf %379 : vector<8x32xf32> to vector<8x32xbf16>
    %cst_157 = arith.constant dense<0.000000e+00> : vector<8x128xf32>
    %382 = tpu.matmul %381, %247, %cst_157 {dimension_numbers = #tpu.dot_dimension_numbers<[1], [0], [0], [1], [0, 0, 1, 1], [], []>} : vector<8x32xbf16>, vector<32x128xbf16>, vector<8x128xf32> -> vector<8x128xf32>
    %383 = arith.addf %380, %382 : vector<8x128xf32>
    %384 = math.tanh %383 : vector<8x128xf32>
    %385 = vector.extract_strided_slice %384 {offsets = [0, 0], sizes = [8, 32], strides = [1, 1]} : vector<8x128xf32> to vector<8x32xf32>
    %cst_158 = arith.constant 5.000000e-01 : f32
    %386 = vector.broadcast %cst_158 : f32 to vector<8x32xf32>
    %387 = arith.mulf %386, %385 : vector<8x32xf32>
    %cst_159 = arith.constant 5.000000e-01 : f32
    %388 = vector.broadcast %cst_159 : f32 to vector<8x32xf32>
    %389 = arith.addf %387, %388 : vector<8x32xf32>
    %390 = vector.extract_strided_slice %384 {offsets = [0, 32], sizes = [8, 32], strides = [1, 1]} : vector<8x128xf32> to vector<8x32xf32>
    %cst_160 = arith.constant 5.000000e-01 : f32
    %391 = vector.broadcast %cst_160 : f32 to vector<8x32xf32>
    %392 = arith.mulf %391, %390 : vector<8x32xf32>
    %cst_161 = arith.constant 5.000000e-01 : f32
    %393 = vector.broadcast %cst_161 : f32 to vector<8x32xf32>
    %394 = arith.addf %392, %393 : vector<8x32xf32>
    %395 = vector.extract_strided_slice %384 {offsets = [0, 64], sizes = [8, 32], strides = [1, 1]} : vector<8x128xf32> to vector<8x32xf32>
    %396 = vector.extract_strided_slice %384 {offsets = [0, 96], sizes = [8, 32], strides = [1, 1]} : vector<8x128xf32> to vector<8x32xf32>
    %cst_162 = arith.constant 5.000000e-01 : f32
    %397 = vector.broadcast %cst_162 : f32 to vector<8x32xf32>
    %398 = arith.mulf %397, %396 : vector<8x32xf32>
    %cst_163 = arith.constant 5.000000e-01 : f32
    %399 = vector.broadcast %cst_163 : f32 to vector<8x32xf32>
    %400 = arith.addf %398, %399 : vector<8x32xf32>
    %401 = arith.mulf %394, %377 : vector<8x32xf32>
    %402 = arith.mulf %389, %395 : vector<8x32xf32>
    %403 = arith.addf %401, %402 : vector<8x32xf32>
    %404 = math.tanh %403 : vector<8x32xf32>
    %405 = arith.mulf %400, %404 : vector<8x32xf32>
    %c48_164 = arith.constant 48 : index
    %c0_165 = arith.constant 0 : index
    %406 = vector.load %arg9[%c48_164, %c0_165] : memref<64x128xf32, #tpu.memory_space<vmem>>, vector<8x128xf32>
    %407 = arith.truncf %405 : vector<8x32xf32> to vector<8x32xbf16>
    %cst_166 = arith.constant dense<0.000000e+00> : vector<8x128xf32>
    %408 = tpu.matmul %407, %247, %cst_166 {dimension_numbers = #tpu.dot_dimension_numbers<[1], [0], [0], [1], [0, 0, 1, 1], [], []>} : vector<8x32xbf16>, vector<32x128xbf16>, vector<8x128xf32> -> vector<8x128xf32>
    %409 = arith.addf %406, %408 : vector<8x128xf32>
    %410 = math.tanh %409 : vector<8x128xf32>
    %411 = vector.extract_strided_slice %410 {offsets = [0, 0], sizes = [8, 32], strides = [1, 1]} : vector<8x128xf32> to vector<8x32xf32>
    %cst_167 = arith.constant 5.000000e-01 : f32
    %412 = vector.broadcast %cst_167 : f32 to vector<8x32xf32>
    %413 = arith.mulf %412, %411 : vector<8x32xf32>
    %cst_168 = arith.constant 5.000000e-01 : f32
    %414 = vector.broadcast %cst_168 : f32 to vector<8x32xf32>
    %415 = arith.addf %413, %414 : vector<8x32xf32>
    %416 = vector.extract_strided_slice %410 {offsets = [0, 32], sizes = [8, 32], strides = [1, 1]} : vector<8x128xf32> to vector<8x32xf32>
    %cst_169 = arith.constant 5.000000e-01 : f32
    %417 = vector.broadcast %cst_169 : f32 to vector<8x32xf32>
    %418 = arith.mulf %417, %416 : vector<8x32xf32>
    %cst_170 = arith.constant 5.000000e-01 : f32
    %419 = vector.broadcast %cst_170 : f32 to vector<8x32xf32>
    %420 = arith.addf %418, %419 : vector<8x32xf32>
    %421 = vector.extract_strided_slice %410 {offsets = [0, 64], sizes = [8, 32], strides = [1, 1]} : vector<8x128xf32> to vector<8x32xf32>
    %422 = vector.extract_strided_slice %410 {offsets = [0, 96], sizes = [8, 32], strides = [1, 1]} : vector<8x128xf32> to vector<8x32xf32>
    %cst_171 = arith.constant 5.000000e-01 : f32
    %423 = vector.broadcast %cst_171 : f32 to vector<8x32xf32>
    %424 = arith.mulf %423, %422 : vector<8x32xf32>
    %cst_172 = arith.constant 5.000000e-01 : f32
    %425 = vector.broadcast %cst_172 : f32 to vector<8x32xf32>
    %426 = arith.addf %424, %425 : vector<8x32xf32>
    %427 = arith.mulf %420, %403 : vector<8x32xf32>
    %428 = arith.mulf %415, %421 : vector<8x32xf32>
    %429 = arith.addf %427, %428 : vector<8x32xf32>
    %430 = math.tanh %429 : vector<8x32xf32>
    %431 = arith.mulf %426, %430 : vector<8x32xf32>
    %c56_173 = arith.constant 56 : index
    %c0_174 = arith.constant 0 : index
    %432 = vector.load %arg9[%c56_173, %c0_174] : memref<64x128xf32, #tpu.memory_space<vmem>>, vector<8x128xf32>
    %433 = arith.truncf %431 : vector<8x32xf32> to vector<8x32xbf16>
    %cst_175 = arith.constant dense<0.000000e+00> : vector<8x128xf32>
    %434 = tpu.matmul %433, %247, %cst_175 {dimension_numbers = #tpu.dot_dimension_numbers<[1], [0], [0], [1], [0, 0, 1, 1], [], []>} : vector<8x32xbf16>, vector<32x128xbf16>, vector<8x128xf32> -> vector<8x128xf32>
    %435 = arith.addf %432, %434 : vector<8x128xf32>
    %436 = math.tanh %435 : vector<8x128xf32>
    %437 = vector.extract_strided_slice %436 {offsets = [0, 0], sizes = [8, 32], strides = [1, 1]} : vector<8x128xf32> to vector<8x32xf32>
    %cst_176 = arith.constant 5.000000e-01 : f32
    %438 = vector.broadcast %cst_176 : f32 to vector<8x32xf32>
    %439 = arith.mulf %438, %437 : vector<8x32xf32>
    %cst_177 = arith.constant 5.000000e-01 : f32
    %440 = vector.broadcast %cst_177 : f32 to vector<8x32xf32>
    %441 = arith.addf %439, %440 : vector<8x32xf32>
    %442 = vector.extract_strided_slice %436 {offsets = [0, 32], sizes = [8, 32], strides = [1, 1]} : vector<8x128xf32> to vector<8x32xf32>
    %cst_178 = arith.constant 5.000000e-01 : f32
    %443 = vector.broadcast %cst_178 : f32 to vector<8x32xf32>
    %444 = arith.mulf %443, %442 : vector<8x32xf32>
    %cst_179 = arith.constant 5.000000e-01 : f32
    %445 = vector.broadcast %cst_179 : f32 to vector<8x32xf32>
    %446 = arith.addf %444, %445 : vector<8x32xf32>
    %447 = vector.extract_strided_slice %436 {offsets = [0, 64], sizes = [8, 32], strides = [1, 1]} : vector<8x128xf32> to vector<8x32xf32>
    %448 = vector.extract_strided_slice %436 {offsets = [0, 96], sizes = [8, 32], strides = [1, 1]} : vector<8x128xf32> to vector<8x32xf32>
    %cst_180 = arith.constant 5.000000e-01 : f32
    %449 = vector.broadcast %cst_180 : f32 to vector<8x32xf32>
    %450 = arith.mulf %449, %448 : vector<8x32xf32>
    %cst_181 = arith.constant 5.000000e-01 : f32
    %451 = vector.broadcast %cst_181 : f32 to vector<8x32xf32>
    %452 = arith.addf %450, %451 : vector<8x32xf32>
    %453 = arith.mulf %446, %429 : vector<8x32xf32>
    %454 = arith.mulf %441, %447 : vector<8x32xf32>
    %455 = arith.addf %453, %454 : vector<8x32xf32>
    %456 = math.tanh %455 : vector<8x32xf32>
    %457 = arith.mulf %452, %456 : vector<8x32xf32>
    %458 = arith.truncf %457 : vector<8x32xf32> to vector<8x32xbf16>
    %c0_182 = arith.constant 0 : index
    %c0_183 = arith.constant 0 : index
    %459 = vector.load %arg6[%c0_182, %c0_183] : memref<32x8xbf16, #tpu.memory_space<vmem>>, vector<32x8xbf16>
    %cst_184 = arith.constant dense<0.000000e+00> : vector<8x8xf32>
    %460 = tpu.matmul %458, %459, %cst_184 {dimension_numbers = #tpu.dot_dimension_numbers<[1], [0], [0], [1], [0, 0, 1, 1], [], []>} : vector<8x32xbf16>, vector<32x8xbf16>, vector<8x8xf32> -> vector<8x8xf32>
    %c0_185 = arith.constant 0 : index
    %c0_186 = arith.constant 0 : index
    %461 = vector.load %arg7[%c0_185, %c0_186] : memref<1x8xf32, #tpu.memory_space<vmem>>, vector<1x8xf32>
    %462 = vector.broadcast %461 : vector<1x8xf32> to vector<8x8xf32>
    %463 = arith.addf %460, %462 : vector<8x8xf32>
    %c0_187 = arith.constant 0 : index
    %c0_188 = arith.constant 0 : index
    %c0_189 = arith.constant 0 : index
    %464 = vector.load %arg8[%c0_187, %c0_188, %c0_189] : memref<1x8x8xf32, #tpu.memory_space<vmem>>, vector<1x8x8xf32>
    %465 = vector.shape_cast %464 : vector<1x8x8xf32> to vector<8x8xf32>
    %466 = vector.shape_cast %463 : vector<8x8xf32> to vector<1x8x8xf32>
    tpu.vector_store %arg8[%c0_187, %c0_188, %c0_189], %466 {strides = array<i32>} : memref<1x8x8xf32, #tpu.memory_space<vmem>>, vector<1x8x8xf32>,
    return
  }
  func.func @transform_0(%arg0: i32) -> (i32, i32, i32) {
    %c0_i32 = arith.constant 0 : i32
    %c0_i32_0 = arith.constant 0 : i32
    %c0_i32_1 = arith.constant 0 : i32
    return %arg0, %c0_i32, %c0_i32_0 : i32, i32, i32
  }
  func.func @transform_1(%arg0: i32) -> (i32, i32) {
    %c0_i32 = arith.constant 0 : i32
    %c0_i32_0 = arith.constant 0 : i32
    %c0_i32_1 = arith.constant 0 : i32
    return %c0_i32, %c0_i32_0 : i32, i32
  }
  func.func @transform_2(%arg0: i32) -> (i32, i32, i32) {
    %c0_i32 = arith.constant 0 : i32
    %c0_i32_0 = arith.constant 0 : i32
    %c0_i32_1 = arith.constant 0 : i32
    %c0_i32_2 = arith.constant 0 : i32
    return %c0_i32, %c0_i32_0, %c0_i32_1 : i32, i32, i32
  }
  func.func @transform_3(%arg0: i32) -> (i32, i32, i32) {
    %c0_i32 = arith.constant 0 : i32
    %c0_i32_0 = arith.constant 0 : i32
    %c0_i32_1 = arith.constant 0 : i32
    %c0_i32_2 = arith.constant 0 : i32
    return %c0_i32, %c0_i32_0, %c0_i32_1 : i32, i32, i32
  }
  func.func @transform_4(%arg0: i32) -> (i32, i32, i32) {
    %c0_i32 = arith.constant 0 : i32
    %c0_i32_0 = arith.constant 0 : i32
    %c0_i32_1 = arith.constant 0 : i32
    %c0_i32_2 = arith.constant 0 : i32
    return %c0_i32, %c0_i32_0, %c0_i32_1 : i32, i32, i32
  }
  func.func @transform_5(%arg0: i32) -> (i32, i32) {
    %c0_i32 = arith.constant 0 : i32
    %c0_i32_0 = arith.constant 0 : i32
    %c0_i32_1 = arith.constant 0 : i32
    return %c0_i32, %c0_i32_0 : i32, i32
  }
  func.func @transform_6(%arg0: i32) -> (i32, i32) {
    %c0_i32 = arith.constant 0 : i32
    %c0_i32_0 = arith.constant 0 : i32
    %c0_i32_1 = arith.constant 0 : i32
    return %c0_i32, %c0_i32_0 : i32, i32
  }
  func.func @transform_7(%arg0: i32) -> (i32, i32, i32) {
    %c0_i32 = arith.constant 0 : i32
    %c0_i32_0 = arith.constant 0 : i32
    %c0_i32_1 = arith.constant 0 : i32
    return %arg0, %c0_i32, %c0_i32_0 : i32, i32, i32
  }
}

</mosaic_0001>

<llo_original>
// kernel: lstm_forward.1
$region0: #{lstm_forward.1}
  #allocation0 [shape = 'u32[]', space=smem, size = 0x4, offset = 0x4, fixed_abs, tag = 'smem constant byte address 0x4 - core index']
  #allocation1 [shape = 'u32[144,128]{1,0:T(1,128)}', space=vmem, size = 0x12000, scoped, tag = 'internal scratch']
  #allocation2 [shape = 'f32[64,128]{1,0:T(8,128)}', space=vmem, size = 0x8000, scoped, tag = 'scratch operand']
  #allocation3 [shape = 'bf16[64,32]{1,0:T(16,128)(2,1)}', space=vmem, size = 0x4000, scoped, tag = 'scratch operand']
  %s0 = inlined_call_operand.vmem [shape: bf16[1,64,16], index: 0, kind: input, shape index: {}]
  %s1 = inlined_call_operand.vmem [shape: bf16[16,128], index: 1, kind: input, shape index: {}]
  %s2 = inlined_call_operand.vmem [shape: bf16[1,32,128], index: 2, kind: input, shape index: {}]
  %s3 = inlined_call_operand.vmem [shape: bf16[2,32,128], index: 3, kind: input, shape index: {}]
  %s4 = inlined_call_operand.vmem [shape: f32[2,1,128], index: 4, kind: input, shape index: {}]
  %s5 = inlined_call_operand.vmem [shape: bf16[32,8], index: 5, kind: input, shape index: {}]
  %s6 = inlined_call_operand.vmem [shape: f32[1,8], index: 6, kind: input, shape index: {}]
  %s7 = inlined_call_operand.vmem [shape: f32[1,8,8], index: 7, kind: output, shape index: {}]
  %s8 = sld [smem:[#allocation0]]
  $region38: #{lstm_forward.1} parent=0
    _
  %s10 = ssub.s32 1, %s8
  %s11 = scalar_select 0, %s10, %s8
  // Predicated region
  $region2: #{lstm_forward.1} parent=0 // pred_check
    _
  $region3: #{lstm_forward.1} parent=0 // pred_check_branch
    %13 = sbr.rel (0) target = $region5
  $region4: #{lstm_forward.1} parent=0 // pred_region
    _
  $region5: #{lstm_forward.1} parent=0 // pred_fallthru
    _
  // Predicated region
  $region6: #{lstm_forward.1} parent=0 // pred_check
    _
  $region7: #{lstm_forward.1} parent=0 // pred_check_branch
    %15 = sbr.rel (0) target = $region9
  $region8: #{lstm_forward.1} parent=0 // pred_region
    _
  $region9: #{lstm_forward.1} parent=0 // pred_fallthru
    _
  // Predicated region
  $region10: #{lstm_forward.1} parent=0 // pred_check
    _
  $region11: #{lstm_forward.1} parent=0 // pred_check_branch
    %17 = sbr.rel (0) target = $region13
  $region12: #{lstm_forward.1} parent=0 // pred_region
    _
  $region13: #{lstm_forward.1} parent=0 // pred_fallthru
    _
  // Predicated region
  $region14: #{lstm_forward.1} parent=0 // pred_check
    _
  $region15: #{lstm_forward.1} parent=0 // pred_check_branch
    %19 = sbr.rel (0) target = $region17
  $region16: #{lstm_forward.1} parent=0 // pred_region
    _
  $region17: #{lstm_forward.1} parent=0 // pred_fallthru
    _
  // Predicated region
  $region18: #{lstm_forward.1} parent=0 // pred_check
    _
  $region19: #{lstm_forward.1} parent=0 // pred_check_branch
    %21 = sbr.rel (0) target = $region21
  $region20: #{lstm_forward.1} parent=0 // pred_region
    _
  $region21: #{lstm_forward.1} parent=0 // pred_fallthru
    _
  // Predicated region
  $region22: #{lstm_forward.1} parent=0 // pred_check
    _
  $region23: #{lstm_forward.1} parent=0 // pred_check_branch
    %23 = sbr.rel (0) target = $region25
  $region24: #{lstm_forward.1} parent=0 // pred_region
    _
  $region25: #{lstm_forward.1} parent=0 // pred_fallthru
    _
  // Predicated region
  $region26: #{lstm_forward.1} parent=0 // pred_check
    _
  $region27: #{lstm_forward.1} parent=0 // pred_check_branch
    %25 = sbr.rel (0) target = $region29
  $region28: #{lstm_forward.1} parent=0 // pred_region
    _
  $region29: #{lstm_forward.1} parent=0 // pred_fallthru
    _
  %v27 = vld [vmem:[%s0] sm:$0xf]
  %v28 = vld [vmem:[%s0 + $0x4] sm:$0xf]
  %v29 = vld [vmem:[%s0 + $0x8] sm:$0xf]
  %v30 = vld [vmem:[%s0 + $0xc] sm:$0xf]
  %v31 = vld [vmem:[%s0 + $0x10] sm:$0xf]
  %v32 = vld [vmem:[%s0 + $0x14] sm:$0xf]
  %v33 = vld [vmem:[%s0 + $0x18] sm:$0xf]
  %v34 = vld [vmem:[%s0 + $0x1c] sm:$0xf]
  %v35 = vld [vmem:[%s1] sm:$0xf]
  %v36 = vld [vmem:[%s1 + $0x4] sm:$0xf]
  %v37 = vld [vmem:[%s4] sm:$0x1]
  %v39 = vlaneseq
  %v40 = vshrl.u32 %v39, 7
  %v41 = vsub.s32 0, %v40
  %v42 = vrot.slane %v37, %v41
  %v52 = vunpack.c.l.b16 %v27
  %v53 = vunpack.c.l.b16 %v28
  %v54 = vunpack.c.l.b16 %v29
  %v55 = vunpack.c.l.b16 %v30
  %v56 = vunpack.c.l.b16 %v31
  %v57 = vunpack.c.l.b16 %v32
  %v58 = vunpack.c.l.b16 %v33
  %v59 = vunpack.c.l.b16 %v34
  %v60 = vpack.c.b16 %v53, %v52
  %v61 = vpack.c.b16 %v55, %v54
  %v62 = vpack.c.b16 %v57, %v56
  %v63 = vpack.c.b16 %v59, %v58
  %v66 = vunpack.c.l.b16 %v35
  %v67 = vunpack.c.l.b16 %v36
  %v68 = vpack.c.b16 %v67, %v66
  %vm70 = vcmask 130048
  %v72 = vsel %vm70, %v60, 0
  %v75 = vsel %vm70, %v61, 0
  %v78 = vsel %vm70, %v62, 0
  %v81 = vsel %vm70, %v63, 0
  %83 = vmatprep.subr.bf16.mxu0 0
  %84 = vmatpush1.bf16.msra.mxu0 %v68
  %85 = vmatprep.subr.bf16.mxu0 0
  %86 = vmatpush1.bf16.msra.mxu0 0
  %87 = vmatprep.subr.bf16.mxu0 0
  %88 = vmatpush1.bf16.msra.mxu0 0
  %89 = vmatprep.subr.bf16.mxu0 0
  %90 = vmatpush1.bf16.msra.mxu0 0
  %91 = vmatprep.subr.bf16.mxu0 0
  %92 = vmatpush1.bf16.msra.mxu0 0
  %93 = vmatprep.subr.bf16.mxu0 0
  %94 = vmatpush1.bf16.msra.mxu0 0
  %95 = vmatprep.subr.bf16.mxu0 0
  %96 = vmatpush1.bf16.msra.mxu0 0
  %97 = vmatprep.subr.bf16.mxu0 0
  %98 = vmatpush1.bf16.msra.mxu0 0
  %99 = vmatprep.subr.bf16.mxu0 0
  %100 = vmatpush1.bf16.msra.mxu0 0
  %101 = vmatprep.subr.bf16.mxu0 0
  %102 = vmatpush1.bf16.msra.mxu0 0
  %103 = vmatprep.subr.bf16.mxu0 0
  %104 = vmatpush1.bf16.msra.mxu0 0
  %105 = vmatprep.subr.bf16.mxu0 0
  %106 = vmatpush1.bf16.msra.mxu0 0
  %107 = vmatprep.subr.bf16.mxu0 0
  %108 = vmatpush1.bf16.msra.mxu0 0
  %109 = vmatprep.subr.bf16.mxu0 0
  %110 = vmatpush1.bf16.msra.mxu0 0
  %111 = vmatprep.subr.bf16.mxu0 0
  %112 = vmatpush1.bf16.msra.mxu0 0
  %113 = vmatprep.subr.bf16.mxu0 0
  %114 = vmatpush1.bf16.msra.mxu0 0
  %115 = vmatprep.mubr.bf16.mxu0 0
  %116 = vmatmul.mubr.bf16.gmra.mrb[0].mxu0 %v72
  %v117 = vpop.f32.mrb[0].mxu0
  %v118 = vadd.f32 %v42, %v117
  %v119 = vpop.f32.mrb[0].mxu0
  %v120 = vpop.f32.mrb[0].mxu0
  %v121 = vadd.f32 %v42, %v120
  %v122 = vpop.f32.mrb[0].mxu0
  %123 = vmatprep.mubr.bf16.mxu0 0
  %124 = vmatmul.mubr.bf16.gmra.mrb[0].mxu0 %v75
  %v125 = vpop.f32.mrb[0].mxu0
  %v126 = vadd.f32 %v42, %v125
  %v127 = vpop.f32.mrb[0].mxu0
  %v128 = vpop.f32.mrb[0].mxu0
  %v129 = vadd.f32 %v42, %v128
  %v130 = vpop.f32.mrb[0].mxu0
  %131 = vmatprep.mubr.bf16.mxu0 0
  %132 = vmatmul.mubr.bf16.gmra.mrb[0].mxu0 %v78
  %v133 = vpop.f32.mrb[0].mxu0
  %v134 = vadd.f32 %v42, %v133
  %v135 = vpop.f32.mrb[0].mxu0
  %v136 = vpop.f32.mrb[0].mxu0
  %v137 = vadd.f32 %v42, %v136
  %v138 = vpop.f32.mrb[0].mxu0
  %139 = vmatprep.mubr.bf16.mxu0 0
  %140 = vmatmul.mubr.bf16.gmra.mrb[0].mxu0 %v81
  %v141 = vpop.f32.mrb[0].mxu0
  %v142 = vadd.f32 %v42, %v141
  %v143 = vpop.f32.mrb[0].mxu0
  %v144 = vpop.f32.mrb[0].mxu0
  %v145 = vadd.f32 %v42, %v144
  %v146 = vpop.f32.mrb[0].mxu0
  %147 = vdwg.mxu0
  %148 = vst [vmem:[#allocation2] sm:$0xff] %v118
  %149 = vst [vmem:[#allocation2 + $0x8] sm:$0xff] %v121
  %150 = vst [vmem:[#allocation2 + $0x10] sm:$0xff] %v126
  %151 = vst [vmem:[#allocation2 + $0x18] sm:$0xff] %v129
  %152 = vst [vmem:[#allocation2 + $0x20] sm:$0xff] %v134
  %153 = vst [vmem:[#allocation2 + $0x28] sm:$0xff] %v137
  %154 = vst [vmem:[#allocation2 + $0x30] sm:$0xff] %v142
  %155 = vst [vmem:[#allocation2 + $0x38] sm:$0xff] %v145
  %v156 = vld [vmem:[%s3] sm:$0xf]
  %v157 = vld [vmem:[%s3 + $0x4] sm:$0xf]
  %v158 = vld [vmem:[%s3 + $0x8] sm:$0xf]
  %v159 = vld [vmem:[%s3 + $0xc] sm:$0xf]
  %v160 = vld [vmem:[#allocation2] sm:$0xff]
  %v165 = vunpack.c.l.b16 %v156
  %v166 = vunpack.c.l.b16 %v157
  %v167 = vunpack.c.l.b16 %v158
  %v168 = vunpack.c.l.b16 %v159
  %v169 = vpack.c.b16 %v166, %v165
  %v170 = vpack.c.b16 %v168, %v167
  %vm173 = vcmask 261120
  %v175 = vsel %vm173, 0, 0
  %177 = vmatprep.subr.bf16.mxu0 0
  %178 = vmatpush1.bf16.msra.mxu0 %v169
  %179 = vmatprep.subr.bf16.mxu0 0
  %180 = vmatpush1.bf16.msra.mxu0 %v170
  %181 = vmatprep.subr.bf16.mxu0 0
  %182 = vmatpush1.bf16.msra.mxu0 0
  %183 = vmatprep.subr.bf16.mxu0 0
  %184 = vmatpush1.bf16.msra.mxu0 0
  %185 = vmatprep.subr.bf16.mxu0 0
  %186 = vmatpush1.bf16.msra.mxu0 0
  %187 = vmatprep.subr.bf16.mxu0 0
  %188 = vmatpush1.bf16.msra.mxu0 0
  %189 = vmatprep.subr.bf16.mxu0 0
  %190 = vmatpush1.bf16.msra.mxu0 0
  %191 = vmatprep.subr.bf16.mxu0 0
  %192 = vmatpush1.bf16.msra.mxu0 0
  %193 = vmatprep.subr.bf16.mxu0 0
  %194 = vmatpush1.bf16.msra.mxu0 0
  %195 = vmatprep.subr.bf16.mxu0 0
  %196 = vmatpush1.bf16.msra.mxu0 0
  %197 = vmatprep.subr.bf16.mxu0 0
  %198 = vmatpush1.bf16.msra.mxu0 0
  %199 = vmatprep.subr.bf16.mxu0 0
  %200 = vmatpush1.bf16.msra.mxu0 0
  %201 = vmatprep.subr.bf16.mxu0 0
  %202 = vmatpush1.bf16.msra.mxu0 0
  %203 = vmatprep.subr.bf16.mxu0 0
  %204 = vmatpush1.bf16.msra.mxu0 0
  %205 = vmatprep.subr.bf16.mxu0 0
  %206 = vmatpush1.bf16.msra.mxu0 0
  %207 = vmatprep.subr.bf16.mxu0 0
  %208 = vmatpush1.bf16.msra.mxu0 0
  %209 = vmatprep.mubr.bf16.mxu0 0
  %210 = vmatmul.mubr.bf16.gmra.mrb[0].mxu0 %v175
  %v211 = vpop.f32.mrb[0].mxu0
  %v212 = vadd.f32 0.0, %v211
  %v213 = vpop.f32.mrb[0].mxu0
  %v214 = vpop.f32.mrb[0].mxu0
  %v215 = vpop.f32.mrb[0].mxu0
  %216 = vdwg.mxu0
  %v217 = vadd.f32 %v160, %v212
  %v218 = vtanh.pop %v217
  %v219 = vmul.f32 %v218, 0.5
  %v220 = vadd.f32 %v219, 0.5
  %v221 = vmul.f32 %v220, 0.0
  %223 = vrot.lane.b32.xlu0 %v218, 64
  %v224 = vpop.permute.xlu0 %223
  %v226 = vmul.f32 %v220, %v224
  %228 = vrot.lane.b32.xlu0 %v226, 32
  %v229 = vpop.permute.xlu0 %228
  %v231 = vadd.f32 %v221, %v229
  %v232 = vtanh.pop %v231
  %234 = vrot.lane.b32.xlu0 %v232, 64
  %v235 = vpop.permute.xlu0 %234
  %v237 = vmul.f32 %v220, %v235
  %v238 = vpack.c.bf16 %v237, %v237
  %240 = vrot.lane.b32.xlu0 %v238, 32
  %v241 = vpop.permute.xlu0 %240
  %vm243 = vcmask 257024
  %244 = vst.msk [vmem:[#allocation3] sm:$0xf] %vm243, %v241
  %v245 = vld [vmem:[#allocation2 + $0x8] sm:$0xff]
  %v247 = vsel %vm173, %v241, 0
  %249 = vmatprep.subr.bf16.mxu0 0
  %250 = vmatpush1.bf16.msra.mxu0 %v169
  %251 = vmatprep.subr.bf16.mxu0 0
  %252 = vmatpush1.bf16.msra.mxu0 %v170
  %253 = vmatprep.subr.bf16.mxu0 0
  %254 = vmatpush1.bf16.msra.mxu0 0
  %255 = vmatprep.subr.bf16.mxu0 0
  %256 = vmatpush1.bf16.msra.mxu0 0
  %257 = vmatprep.subr.bf16.mxu0 0
  %258 = vmatpush1.bf16.msra.mxu0 0
  %259 = vmatprep.subr.bf16.mxu0 0
  %260 = vmatpush1.bf16.msra.mxu0 0
  %261 = vmatprep.subr.bf16.mxu0 0
  %262 = vmatpush1.bf16.msra.mxu0 0
  %263 = vmatprep.subr.bf16.mxu0 0
  %264 = vmatpush1.bf16.msra.mxu0 0
  %265 = vmatprep.subr.bf16.mxu0 0
  %266 = vmatpush1.bf16.msra.mxu0 0
  %267 = vmatprep.subr.bf16.mxu0 0
  %268 = vmatpush1.bf16.msra.mxu0 0
  %269 = vmatprep.subr.bf16.mxu0 0
  %270 = vmatpush1.bf16.msra.mxu0 0
  %271 = vmatprep.subr.bf16.mxu0 0
  %272 = vmatpush1.bf16.msra.mxu0 0
  %273 = vmatprep.subr.bf16.mxu0 0
  %274 = vmatpush1.bf16.msra.mxu0 0
  %275 = vmatprep.subr.bf16.mxu0 0
  %276 = vmatpush1.bf16.msra.mxu0 0
  %277 = vmatprep.subr.bf16.mxu0 0
  %278 = vmatpush1.bf16.msra.mxu0 0
  %279 = vmatprep.subr.bf16.mxu0 0
  %280 = vmatpush1.bf16.msra.mxu0 0
  %281 = vmatprep.mubr.bf16.mxu0 0
  %282 = vmatmul.mubr.bf16.gmra.mrb[0].mxu0 %v247
  %v283 = vpop.f32.mrb[0].mxu0
  %v284 = vadd.f32 0.0, %v283
  %v285 = vpop.f32.mrb[0].mxu0
  %v286 = vpop.f32.mrb[0].mxu0
  %v287 = vpop.f32.mrb[0].mxu0
  %288 = vdwg.mxu0
  %v289 = vadd.f32 %v245, %v284
  %v290 = vtanh.pop %v289
  %v291 = vmul.f32 %v290, 0.5
  %v292 = vadd.f32 %v291, 0.5
  %v293 = vmul.f32 %v292, %v231
  %295 = vrot.lane.b32.xlu0 %v290, 64
  %v296 = vpop.permute.xlu0 %295
  %v298 = vmul.f32 %v292, %v296
  %300 = vrot.lane.b32.xlu0 %v298, 32
  %v301 = vpop.permute.xlu0 %300
  %v303 = vadd.f32 %v293, %v301
  %v304 = vtanh.pop %v303
  %306 = vrot.lane.b32.xlu0 %v304, 64
  %v307 = vpop.permute.xlu0 %306
  %v309 = vmul.f32 %v292, %v307
  %v310 = vpack.c.bf16 %v309, %v309
  %v312 = vrot.slane %v310, 4
  %313 = vrot.lane.b32.xlu0 %v312, 32
  %v314 = vpop.permute.xlu0 %313
  %vm316 = vcmask 261124
  %317 = vst.msk [vmem:[#allocation3] sm:$0xf0] %vm316, %v314
  %v318 = vld [vmem:[#allocation2 + $0x10] sm:$0xff]
  %319 = vrot.lane.b32.xlu0 %v310, 32
  %v320 = vpop.permute.xlu0 %319
  %v322 = vsel %vm173, %v320, 0
  %324 = vmatprep.subr.bf16.mxu0 0
  %325 = vmatpush1.bf16.msra.mxu0 %v169
  %326 = vmatprep.subr.bf16.mxu0 0
  %327 = vmatpush1.bf16.msra.mxu0 %v170
  %328 = vmatprep.subr.bf16.mxu0 0
  %329 = vmatpush1.bf16.msra.mxu0 0
  %330 = vmatprep.subr.bf16.mxu0 0
  %331 = vmatpush1.bf16.msra.mxu0 0
  %332 = vmatprep.subr.bf16.mxu0 0
  %333 = vmatpush1.bf16.msra.mxu0 0
  %334 = vmatprep.subr.bf16.mxu0 0
  %335 = vmatpush1.bf16.msra.mxu0 0
  %336 = vmatprep.subr.bf16.mxu0 0
  %337 = vmatpush1.bf16.msra.mxu0 0
  %338 = vmatprep.subr.bf16.mxu0 0
  %339 = vmatpush1.bf16.msra.mxu0 0
  %340 = vmatprep.subr.bf16.mxu0 0
  %341 = vmatpush1.bf16.msra.mxu0 0
  %342 = vmatprep.subr.bf16.mxu0 0
  %343 = vmatpush1.bf16.msra.mxu0 0
  %344 = vmatprep.subr.bf16.mxu0 0
  %345 = vmatpush1.bf16.msra.mxu0 0
  %346 = vmatprep.subr.bf16.mxu0 0
  %347 = vmatpush1.bf16.msra.mxu0 0
  %348 = vmatprep.subr.bf16.mxu0 0
  %349 = vmatpush1.bf16.msra.mxu0 0
  %350 = vmatprep.subr.bf16.mxu0 0
  %351 = vmatpush1.bf16.msra.mxu0 0
  %352 = vmatprep.subr.bf16.mxu0 0
  %353 = vmatpush1.bf16.msra.mxu0 0
  %354 = vmatprep.subr.bf16.mxu0 0
  %355 = vmatpush1.bf16.msra.mxu0 0
  %356 = vmatprep.mubr.bf16.mxu0 0
  %357 = vmatmul.mubr.bf16.gmra.mrb[0].mxu0 %v322
  %v358 = vpop.f32.mrb[0].mxu0
  %v359 = vadd.f32 0.0, %v358
  %v360 = vpop.f32.mrb[0].mxu0
  %v361 = vpop.f32.mrb[0].mxu0
  %v362 = vpop.f32.mrb[0].mxu0
  %363 = vdwg.mxu0
  %v364 = vadd.f32 %v318, %v359
  %v365 = vtanh.pop %v364
  %v366 = vmul.f32 %v365, 0.5
  %v367 = vadd.f32 %v366, 0.5
  %v368 = vmul.f32 %v367, %v303
  %370 = vrot.lane.b32.xlu0 %v365, 64
  %v371 = vpop.permute.xlu0 %370
  %v373 = vmul.f32 %v367, %v371
  %375 = vrot.lane.b32.xlu0 %v373, 32
  %v376 = vpop.permute.xlu0 %375
  %v378 = vadd.f32 %v368, %v376
  %v379 = vtanh.pop %v378
  %381 = vrot.lane.b32.xlu0 %v379, 64
  %v382 = vpop.permute.xlu0 %381
  %v384 = vmul.f32 %v367, %v382
  %v385 = vpack.c.bf16 %v384, %v384
  %387 = vrot.lane.b32.xlu0 %v385, 32
  %v388 = vpop.permute.xlu0 %387
  %390 = vst.msk [vmem:[#allocation3 + $0x8] sm:$0xf] %vm243, %v388
  %v391 = vld [vmem:[#allocation2 + $0x18] sm:$0xff]
  %v393 = vsel %vm173, %v388, 0
  %395 = vmatprep.subr.bf16.mxu0 0
  %396 = vmatpush1.bf16.msra.mxu0 %v169
  %397 = vmatprep.subr.bf16.mxu0 0
  %398 = vmatpush1.bf16.msra.mxu0 %v170
  %399 = vmatprep.subr.bf16.mxu0 0
  %400 = vmatpush1.bf16.msra.mxu0 0
  %401 = vmatprep.subr.bf16.mxu0 0
  %402 = vmatpush1.bf16.msra.mxu0 0
  %403 = vmatprep.subr.bf16.mxu0 0
  %404 = vmatpush1.bf16.msra.mxu0 0
  %405 = vmatprep.subr.bf16.mxu0 0
  %406 = vmatpush1.bf16.msra.mxu0 0
  %407 = vmatprep.subr.bf16.mxu0 0
  %408 = vmatpush1.bf16.msra.mxu0 0
  %409 = vmatprep.subr.bf16.mxu0 0
  %410 = vmatpush1.bf16.msra.mxu0 0
  %411 = vmatprep.subr.bf16.mxu0 0
  %412 = vmatpush1.bf16.msra.mxu0 0
  %413 = vmatprep.subr.bf16.mxu0 0
  %414 = vmatpush1.bf16.msra.mxu0 0
  %415 = vmatprep.subr.bf16.mxu0 0
  %416 = vmatpush1.bf16.msra.mxu0 0
  %417 = vmatprep.subr.bf16.mxu0 0
  %418 = vmatpush1.bf16.msra.mxu0 0
  %419 = vmatprep.subr.bf16.mxu0 0
  %420 = vmatpush1.bf16.msra.mxu0 0
  %421 = vmatprep.subr.bf16.mxu0 0
  %422 = vmatpush1.bf16.msra.mxu0 0
  %423 = vmatprep.subr.bf16.mxu0 0
  %424 = vmatpush1.bf16.msra.mxu0 0
  %425 = vmatprep.subr.bf16.mxu0 0
  %426 = vmatpush1.bf16.msra.mxu0 0
  %427 = vmatprep.mubr.bf16.mxu0 0
  %428 = vmatmul.mubr.bf16.gmra.mrb[0].mxu0 %v393
  %v429 = vpop.f32.mrb[0].mxu0
  %v430 = vadd.f32 0.0, %v429
  %v431 = vpop.f32.mrb[0].mxu0
  %v432 = vpop.f32.mrb[0].mxu0
  %v433 = vpop.f32.mrb[0].mxu0
  %434 = vdwg.mxu0
  %v435 = vadd.f32 %v391, %v430
  %v436 = vtanh.pop %v435
  %v437 = vmul.f32 %v436, 0.5
  %v438 = vadd.f32 %v437, 0.5
  %v439 = vmul.f32 %v438, %v378
  %441 = vrot.lane.b32.xlu0 %v436, 64
  %v442 = vpop.permute.xlu0 %441
  %v444 = vmul.f32 %v438, %v442
  %446 = vrot.lane.b32.xlu0 %v444, 32
  %v447 = vpop.permute.xlu0 %446
  %v449 = vadd.f32 %v439, %v447
  %v450 = vtanh.pop %v449
  %452 = vrot.lane.b32.xlu0 %v450, 64
  %v453 = vpop.permute.xlu0 %452
  %v455 = vmul.f32 %v438, %v453
  %v456 = vpack.c.bf16 %v455, %v455
  %v458 = vrot.slane %v456, 4
  %459 = vrot.lane.b32.xlu0 %v458, 32
  %v460 = vpop.permute.xlu0 %459
  %462 = vst.msk [vmem:[#allocation3 + $0x8] sm:$0xf0] %vm316, %v460
  %v463 = vld [vmem:[#allocation2 + $0x20] sm:$0xff]
  %464 = vrot.lane.b32.xlu0 %v456, 32
  %v465 = vpop.permute.xlu0 %464
  %v467 = vsel %vm173, %v465, 0
  %469 = vmatprep.subr.bf16.mxu0 0
  %470 = vmatpush1.bf16.msra.mxu0 %v169
  %471 = vmatprep.subr.bf16.mxu0 0
  %472 = vmatpush1.bf16.msra.mxu0 %v170
  %473 = vmatprep.subr.bf16.mxu0 0
  %474 = vmatpush1.bf16.msra.mxu0 0
  %475 = vmatprep.subr.bf16.mxu0 0
  %476 = vmatpush1.bf16.msra.mxu0 0
  %477 = vmatprep.subr.bf16.mxu0 0
  %478 = vmatpush1.bf16.msra.mxu0 0
  %479 = vmatprep.subr.bf16.mxu0 0
  %480 = vmatpush1.bf16.msra.mxu0 0
  %481 = vmatprep.subr.bf16.mxu0 0
  %482 = vmatpush1.bf16.msra.mxu0 0
  %483 = vmatprep.subr.bf16.mxu0 0
  %484 = vmatpush1.bf16.msra.mxu0 0
  %485 = vmatprep.subr.bf16.mxu0 0
  %486 = vmatpush1.bf16.msra.mxu0 0
  %487 = vmatprep.subr.bf16.mxu0 0
  %488 = vmatpush1.bf16.msra.mxu0 0
  %489 = vmatprep.subr.bf16.mxu0 0
  %490 = vmatpush1.bf16.msra.mxu0 0
  %491 = vmatprep.subr.bf16.mxu0 0
  %492 = vmatpush1.bf16.msra.mxu0 0
  %493 = vmatprep.subr.bf16.mxu0 0
  %494 = vmatpush1.bf16.msra.mxu0 0
  %495 = vmatprep.subr.bf16.mxu0 0
  %496 = vmatpush1.bf16.msra.mxu0 0
  %497 = vmatprep.subr.bf16.mxu0 0
  %498 = vmatpush1.bf16.msra.mxu0 0
  %499 = vmatprep.subr.bf16.mxu0 0
  %500 = vmatpush1.bf16.msra.mxu0 0
  %501 = vmatprep.mubr.bf16.mxu0 0
  %502 = vmatmul.mubr.bf16.gmra.mrb[0].mxu0 %v467
  %v503 = vpop.f32.mrb[0].mxu0
  %v504 = vadd.f32 0.0, %v503
  %v505 = vpop.f32.mrb[0].mxu0
  %v506 = vpop.f32.mrb[0].mxu0
  %v507 = vpop.f32.mrb[0].mxu0
  %508 = vdwg.mxu0
  %v509 = vadd.f32 %v463, %v504
  %v510 = vtanh.pop %v509
  %v511 = vmul.f32 %v510, 0.5
  %v512 = vadd.f32 %v511, 0.5
  %v513 = vmul.f32 %v512, %v449
  %515 = vrot.lane.b32.xlu0 %v510, 64
  %v516 = vpop.permute.xlu0 %515
  %v518 = vmul.f32 %v512, %v516
  %520 = vrot.lane.b32.xlu0 %v518, 32
  %v521 = vpop.permute.xlu0 %520
  %v523 = vadd.f32 %v513, %v521
  %v524 = vtanh.pop %v523
  %526 = vrot.lane.b32.xlu0 %v524, 64
  %v527 = vpop.permute.xlu0 %526
  %v529 = vmul.f32 %v512, %v527
  %v530 = vpack.c.bf16 %v529, %v529
  %532 = vrot.lane.b32.xlu0 %v530, 32
  %v533 = vpop.permute.xlu0 %532
  %535 = vst.msk [vmem:[#allocation3 + $0x10] sm:$0xf] %vm243, %v533
  %v536 = vld [vmem:[#allocation2 + $0x28] sm:$0xff]
  %v538 = vsel %vm173, %v533, 0
  %540 = vmatprep.subr.bf16.mxu0 0
  %541 = vmatpush1.bf16.msra.mxu0 %v169
  %542 = vmatprep.subr.bf16.mxu0 0
  %543 = vmatpush1.bf16.msra.mxu0 %v170
  %544 = vmatprep.subr.bf16.mxu0 0
  %545 = vmatpush1.bf16.msra.mxu0 0
  %546 = vmatprep.subr.bf16.mxu0 0
  %547 = vmatpush1.bf16.msra.mxu0 0
  %548 = vmatprep.subr.bf16.mxu0 0
  %549 = vmatpush1.bf16.msra.mxu0 0
  %550 = vmatprep.subr.bf16.mxu0 0
  %551 = vmatpush1.bf16.msra.mxu0 0
  %552 = vmatprep.subr.bf16.mxu0 0
  %553 = vmatpush1.bf16.msra.mxu0 0
  %554 = vmatprep.subr.bf16.mxu0 0
  %555 = vmatpush1.bf16.msra.mxu0 0
  %556 = vmatprep.subr.bf16.mxu0 0
  %557 = vmatpush1.bf16.msra.mxu0 0
  %558 = vmatprep.subr.bf16.mxu0 0
  %559 = vmatpush1.bf16.msra.mxu0 0
  %560 = vmatprep.subr.bf16.mxu0 0
  %561 = vmatpush1.bf16.msra.mxu0 0
  %562 = vmatprep.subr.bf16.mxu0 0
  %563 = vmatpush1.bf16.msra.mxu0 0
  %564 = vmatprep.subr.bf16.mxu0 0
  %565 = vmatpush1.bf16.msra.mxu0 0
  %566 = vmatprep.subr.bf16.mxu0 0
  %567 = vmatpush1.bf16.msra.mxu0 0
  %568 = vmatprep.subr.bf16.mxu0 0
  %569 = vmatpush1.bf16.msra.mxu0 0
  %570 = vmatprep.subr.bf16.mxu0 0
  %571 = vmatpush1.bf16.msra.mxu0 0
  %572 = vmatprep.mubr.bf16.mxu0 0
  %573 = vmatmul.mubr.bf16.gmra.mrb[0].mxu0 %v538
  %v574 = vpop.f32.mrb[0].mxu0
  %v575 = vadd.f32 0.0, %v574
  %v576 = vpop.f32.mrb[0].mxu0
  %v577 = vpop.f32.mrb[0].mxu0
  %v578 = vpop.f32.mrb[0].mxu0
  %579 = vdwg.mxu0
  %v580 = vadd.f32 %v536, %v575
  %v581 = vtanh.pop %v580
  %v582 = vmul.f32 %v581, 0.5
  %v583 = vadd.f32 %v582, 0.5
  %v584 = vmul.f32 %v583, %v523
  %586 = vrot.lane.b32.xlu0 %v581, 64
  %v587 = vpop.permute.xlu0 %586
  %v589 = vmul.f32 %v583, %v587
  %591 = vrot.lane.b32.xlu0 %v589, 32
  %v592 = vpop.permute.xlu0 %591
  %v594 = vadd.f32 %v584, %v592
  %v595 = vtanh.pop %v594
  %597 = vrot.lane.b32.xlu0 %v595, 64
  %v598 = vpop.permute.xlu0 %597
  %v600 = vmul.f32 %v583, %v598
  %v601 = vpack.c.bf16 %v600, %v600
  %v603 = vrot.slane %v601, 4
  %604 = vrot.lane.b32.xlu0 %v603, 32
  %v605 = vpop.permute.xlu0 %604
  %607 = vst.msk [vmem:[#allocation3 + $0x10] sm:$0xf0] %vm316, %v605
  %v608 = vld [vmem:[#allocation2 + $0x30] sm:$0xff]
  %609 = vrot.lane.b32.xlu0 %v601, 32
  %v610 = vpop.permute.xlu0 %609
  %v612 = vsel %vm173, %v610, 0
  %614 = vmatprep.subr.bf16.mxu0 0
  %615 = vmatpush1.bf16.msra.mxu0 %v169
  %616 = vmatprep.subr.bf16.mxu0 0
  %617 = vmatpush1.bf16.msra.mxu0 %v170
  %618 = vmatprep.subr.bf16.mxu0 0
  %619 = vmatpush1.bf16.msra.mxu0 0
  %620 = vmatprep.subr.bf16.mxu0 0
  %621 = vmatpush1.bf16.msra.mxu0 0
  %622 = vmatprep.subr.bf16.mxu0 0
  %623 = vmatpush1.bf16.msra.mxu0 0
  %624 = vmatprep.subr.bf16.mxu0 0
  %625 = vmatpush1.bf16.msra.mxu0 0
  %626 = vmatprep.subr.bf16.mxu0 0
  %627 = vmatpush1.bf16.msra.mxu0 0
  %628 = vmatprep.subr.bf16.mxu0 0
  %629 = vmatpush1.bf16.msra.mxu0 0
  %630 = vmatprep.subr.bf16.mxu0 0
  %631 = vmatpush1.bf16.msra.mxu0 0
  %632 = vmatprep.subr.bf16.mxu0 0
  %633 = vmatpush1.bf16.msra.mxu0 0
  %634 = vmatprep.subr.bf16.mxu0 0
  %635 = vmatpush1.bf16.msra.mxu0 0
  %636 = vmatprep.subr.bf16.mxu0 0
  %637 = vmatpush1.bf16.msra.mxu0 0
  %638 = vmatprep.subr.bf16.mxu0 0
  %639 = vmatpush1.bf16.msra.mxu0 0
  %640 = vmatprep.subr.bf16.mxu0 0
  %641 = vmatpush1.bf16.msra.mxu0 0
  %642 = vmatprep.subr.bf16.mxu0 0
  %643 = vmatpush1.bf16.msra.mxu0 0
  %644 = vmatprep.subr.bf16.mxu0 0
  %645 = vmatpush1.bf16.msra.mxu0 0
  %646 = vmatprep.mubr.bf16.mxu0 0
  %647 = vmatmul.mubr.bf16.gmra.mrb[0].mxu0 %v612
  %v648 = vpop.f32.mrb[0].mxu0
  %v649 = vadd.f32 0.0, %v648
  %v650 = vpop.f32.mrb[0].mxu0
  %v651 = vpop.f32.mrb[0].mxu0
  %v652 = vpop.f32.mrb[0].mxu0
  %653 = vdwg.mxu0
  %v654 = vadd.f32 %v608, %v649
  %v655 = vtanh.pop %v654
  %v656 = vmul.f32 %v655, 0.5
  %v657 = vadd.f32 %v656, 0.5
  %v658 = vmul.f32 %v657, %v594
  %660 = vrot.lane.b32.xlu0 %v655, 64
  %v661 = vpop.permute.xlu0 %660
  %v663 = vmul.f32 %v657, %v661
  %665 = vrot.lane.b32.xlu0 %v663, 32
  %v666 = vpop.permute.xlu0 %665
  %v668 = vadd.f32 %v658, %v666
  %v669 = vtanh.pop %v668
  %671 = vrot.lane.b32.xlu0 %v669, 64
  %v672 = vpop.permute.xlu0 %671
  %v674 = vmul.f32 %v657, %v672
  %v675 = vpack.c.bf16 %v674, %v674
  %677 = vrot.lane.b32.xlu0 %v675, 32
  %v678 = vpop.permute.xlu0 %677
  %680 = vst.msk [vmem:[#allocation3 + $0x18] sm:$0xf] %vm243, %v678
  %v681 = vld [vmem:[#allocation2 + $0x38] sm:$0xff]
  %v683 = vsel %vm173, %v678, 0
  %685 = vmatprep.subr.bf16.mxu0 0
  %686 = vmatpush1.bf16.msra.mxu0 %v169
  %687 = vmatprep.subr.bf16.mxu0 0
  %688 = vmatpush1.bf16.msra.mxu0 %v170
  %689 = vmatprep.subr.bf16.mxu0 0
  %690 = vmatpush1.bf16.msra.mxu0 0
  %691 = vmatprep.subr.bf16.mxu0 0
  %692 = vmatpush1.bf16.msra.mxu0 0
  %693 = vmatprep.subr.bf16.mxu0 0
  %694 = vmatpush1.bf16.msra.mxu0 0
  %695 = vmatprep.subr.bf16.mxu0 0
  %696 = vmatpush1.bf16.msra.mxu0 0
  %697 = vmatprep.subr.bf16.mxu0 0
  %698 = vmatpush1.bf16.msra.mxu0 0
  %699 = vmatprep.subr.bf16.mxu0 0
  %700 = vmatpush1.bf16.msra.mxu0 0
  %701 = vmatprep.subr.bf16.mxu0 0
  %702 = vmatpush1.bf16.msra.mxu0 0
  %703 = vmatprep.subr.bf16.mxu0 0
  %704 = vmatpush1.bf16.msra.mxu0 0
  %705 = vmatprep.subr.bf16.mxu0 0
  %706 = vmatpush1.bf16.msra.mxu0 0
  %707 = vmatprep.subr.bf16.mxu0 0
  %708 = vmatpush1.bf16.msra.mxu0 0
  %709 = vmatprep.subr.bf16.mxu0 0
  %710 = vmatpush1.bf16.msra.mxu0 0
  %711 = vmatprep.subr.bf16.mxu0 0
  %712 = vmatpush1.bf16.msra.mxu0 0
  %713 = vmatprep.subr.bf16.mxu0 0
  %714 = vmatpush1.bf16.msra.mxu0 0
  %715 = vmatprep.subr.bf16.mxu0 0
  %716 = vmatpush1.bf16.msra.mxu0 0
  %717 = vmatprep.mubr.bf16.mxu0 0
  %718 = vmatmul.mubr.bf16.gmra.mrb[0].mxu0 %v683
  %v719 = vpop.f32.mrb[0].mxu0
  %v720 = vadd.f32 0.0, %v719
  %v721 = vpop.f32.mrb[0].mxu0
  %v722 = vpop.f32.mrb[0].mxu0
  %v723 = vpop.f32.mrb[0].mxu0
  %724 = vdwg.mxu0
  %v725 = vadd.f32 %v681, %v720
  %v726 = vtanh.pop %v725
  %v727 = vmul.f32 %v726, 0.5
  %v728 = vadd.f32 %v727, 0.5
  %v729 = vmul.f32 %v728, %v668
  %731 = vrot.lane.b32.xlu0 %v726, 64
  %v732 = vpop.permute.xlu0 %731
  %v734 = vmul.f32 %v728, %v732
  %736 = vrot.lane.b32.xlu0 %v734, 32
  %v737 = vpop.permute.xlu0 %736
  %v739 = vadd.f32 %v729, %v737
  %v740 = vtanh.pop %v739
  %742 = vrot.lane.b32.xlu0 %v740, 64
  %v743 = vpop.permute.xlu0 %742
  %v745 = vmul.f32 %v728, %v743
  %v746 = vpack.c.bf16 %v745, %v745
  %v748 = vrot.slane %v746, 4
  %749 = vrot.lane.b32.xlu0 %v748, 32
  %v750 = vpop.permute.xlu0 %749
  %752 = vst.msk [vmem:[#allocation3 + $0x18] sm:$0xf0] %vm316, %v750
  %v753 = vld [vmem:[#allocation3] sm:$0xff]
  %v754 = vld [vmem:[#allocation3 + $0x8] sm:$0xff]
  %v755 = vld [vmem:[#allocation3 + $0x10] sm:$0xff]
  %v756 = vld [vmem:[#allocation3 + $0x18] sm:$0xff]
  %v757 = vld [vmem:[%s2] sm:$0xf]
  %v758 = vld [vmem:[%s2 + $0x4] sm:$0xf]
  %v759 = vld [vmem:[%s2 + $0x8] sm:$0xf]
  %v760 = vld [vmem:[%s2 + $0xc] sm:$0xf]
  %s761 = scalar_lea.vmem %s4, 1
  %v762 = vld [vmem:[%s761] sm:$0x1]
  %v764 = vlaneseq
  %v765 = vshrl.u32 %v764, 7
  %v766 = vsub.s32 0, %v765
  %v767 = vrot.slane %v762, %v766
  %v773 = vunpack.c.l.b16 %v757
  %v774 = vunpack.c.l.b16 %v758
  %v775 = vunpack.c.l.b16 %v759
  %v776 = vunpack.c.l.b16 %v760
  %v777 = vpack.c.b16 %v774, %v773
  %v778 = vpack.c.b16 %v776, %v775
  %v782 = vsel %vm173, %v753, 0
  %v785 = vsel %vm173, %v754, 0
  %v788 = vsel %vm173, %v755, 0
  %v791 = vsel %vm173, %v756, 0
  %793 = vmatprep.subr.bf16.mxu0 0
  %794 = vmatpush1.bf16.msra.mxu0 %v777
  %795 = vmatprep.subr.bf16.mxu0 0
  %796 = vmatpush1.bf16.msra.mxu0 %v778
  %797 = vmatprep.subr.bf16.mxu0 0
  %798 = vmatpush1.bf16.msra.mxu0 0
  %799 = vmatprep.subr.bf16.mxu0 0
  %800 = vmatpush1.bf16.msra.mxu0 0
  %801 = vmatprep.subr.bf16.mxu0 0
  %802 = vmatpush1.bf16.msra.mxu0 0
  %803 = vmatprep.subr.bf16.mxu0 0
  %804 = vmatpush1.bf16.msra.mxu0 0
  %805 = vmatprep.subr.bf16.mxu0 0
  %806 = vmatpush1.bf16.msra.mxu0 0
  %807 = vmatprep.subr.bf16.mxu0 0
  %808 = vmatpush1.bf16.msra.mxu0 0
  %809 = vmatprep.subr.bf16.mxu0 0
  %810 = vmatpush1.bf16.msra.mxu0 0
  %811 = vmatprep.subr.bf16.mxu0 0
  %812 = vmatpush1.bf16.msra.mxu0 0
  %813 = vmatprep.subr.bf16.mxu0 0
  %814 = vmatpush1.bf16.msra.mxu0 0
  %815 = vmatprep.subr.bf16.mxu0 0
  %816 = vmatpush1.bf16.msra.mxu0 0
  %817 = vmatprep.subr.bf16.mxu0 0
  %818 = vmatpush1.bf16.msra.mxu0 0
  %819 = vmatprep.subr.bf16.mxu0 0
  %820 = vmatpush1.bf16.msra.mxu0 0
  %821 = vmatprep.subr.bf16.mxu0 0
  %822 = vmatpush1.bf16.msra.mxu0 0
  %823 = vmatprep.subr.bf16.mxu0 0
  %824 = vmatpush1.bf16.msra.mxu0 0
  %825 = vmatprep.mubr.bf16.mxu0 0
  %826 = vmatmul.mubr.bf16.gmra.mrb[0].mxu0 %v782
  %v827 = vpop.f32.mrb[0].mxu0
  %v828 = vadd.f32 %v767, %v827
  %v829 = vpop.f32.mrb[0].mxu0
  %v830 = vpop.f32.mrb[0].mxu0
  %v831 = vadd.f32 %v767, %v830
  %v832 = vpop.f32.mrb[0].mxu0
  %833 = vmatprep.mubr.bf16.mxu0 0
  %834 = vmatmul.mubr.bf16.gmra.mrb[0].mxu0 %v785
  %v835 = vpop.f32.mrb[0].mxu0
  %v836 = vadd.f32 %v767, %v835
  %v837 = vpop.f32.mrb[0].mxu0
  %v838 = vpop.f32.mrb[0].mxu0
  %v839 = vadd.f32 %v767, %v838
  %v840 = vpop.f32.mrb[0].mxu0
  %841 = vmatprep.mubr.bf16.mxu0 0
  %842 = vmatmul.mubr.bf16.gmra.mrb[0].mxu0 %v788
  %v843 = vpop.f32.mrb[0].mxu0
  %v844 = vadd.f32 %v767, %v843
  %v845 = vpop.f32.mrb[0].mxu0
  %v846 = vpop.f32.mrb[0].mxu0
  %v847 = vadd.f32 %v767, %v846
  %v848 = vpop.f32.mrb[0].mxu0
  %849 = vmatprep.mubr.bf16.mxu0 0
  %850 = vmatmul.mubr.bf16.gmra.mrb[0].mxu0 %v791
  %v851 = vpop.f32.mrb[0].mxu0
  %v852 = vadd.f32 %v767, %v851
  %v853 = vpop.f32.mrb[0].mxu0
  %v854 = vpop.f32.mrb[0].mxu0
  %v855 = vadd.f32 %v767, %v854
  %v856 = vpop.f32.mrb[0].mxu0
  %857 = vdwg.mxu0
  %858 = vst [vmem:[#allocation2] sm:$0xff] %v828
  %859 = vst [vmem:[#allocation2 + $0x8] sm:$0xff] %v831
  %860 = vst [vmem:[#allocation2 + $0x10] sm:$0xff] %v836
  %861 = vst [vmem:[#allocation2 + $0x18] sm:$0xff] %v839
  %862 = vst [vmem:[#allocation2 + $0x20] sm:$0xff] %v844
  %863 = vst [vmem:[#allocation2 + $0x28] sm:$0xff] %v847
  %864 = vst [vmem:[#allocation2 + $0x30] sm:$0xff] %v852
  %865 = vst [vmem:[#allocation2 + $0x38] sm:$0xff] %v855
  %s866 = scalar_lea.vmem %s3, 16
  %v867 = vld [vmem:[%s866] sm:$0xf]
  %v868 = vld [vmem:[%s866 + $0x4] sm:$0xf]
  %v869 = vld [vmem:[%s866 + $0x8] sm:$0xf]
  %v870 = vld [vmem:[%s866 + $0xc] sm:$0xf]
  %v871 = vld [vmem:[#allocation2] sm:$0xff]
  %v876 = vunpack.c.l.b16 %v867
  %v877 = vunpack.c.l.b16 %v868
  %v878 = vunpack.c.l.b16 %v869
  %v879 = vunpack.c.l.b16 %v870
  %v880 = vpack.c.b16 %v877, %v876
  %v881 = vpack.c.b16 %v879, %v878
  %884 = vmatprep.subr.bf16.mxu0 0
  %885 = vmatpush1.bf16.msra.mxu0 %v880
  %886 = vmatprep.subr.bf16.mxu0 0
  %887 = vmatpush1.bf16.msra.mxu0 %v881
  %888 = vmatprep.subr.bf16.mxu0 0
  %889 = vmatpush1.bf16.msra.mxu0 0
  %890 = vmatprep.subr.bf16.mxu0 0
  %891 = vmatpush1.bf16.msra.mxu0 0
  %892 = vmatprep.subr.bf16.mxu0 0
  %893 = vmatpush1.bf16.msra.mxu0 0
  %894 = vmatprep.subr.bf16.mxu0 0
  %895 = vmatpush1.bf16.msra.mxu0 0
  %896 = vmatprep.subr.bf16.mxu0 0
  %897 = vmatpush1.bf16.msra.mxu0 0
  %898 = vmatprep.subr.bf16.mxu0 0
  %899 = vmatpush1.bf16.msra.mxu0 0
  %900 = vmatprep.subr.bf16.mxu0 0
  %901 = vmatpush1.bf16.msra.mxu0 0
  %902 = vmatprep.subr.bf16.mxu0 0
  %903 = vmatpush1.bf16.msra.mxu0 0
  %904 = vmatprep.subr.bf16.mxu0 0
  %905 = vmatpush1.bf16.msra.mxu0 0
  %906 = vmatprep.subr.bf16.mxu0 0
  %907 = vmatpush1.bf16.msra.mxu0 0
  %908 = vmatprep.subr.bf16.mxu0 0
  %909 = vmatpush1.bf16.msra.mxu0 0
  %910 = vmatprep.subr.bf16.mxu0 0
  %911 = vmatpush1.bf16.msra.mxu0 0
  %912 = vmatprep.subr.bf16.mxu0 0
  %913 = vmatpush1.bf16.msra.mxu0 0
  %914 = vmatprep.subr.bf16.mxu0 0
  %915 = vmatpush1.bf16.msra.mxu0 0
  %916 = vmatprep.mubr.bf16.mxu0 0
  %917 = vmatmul.mubr.bf16.gmra.mrb[0].mxu0 %v175
  %v918 = vpop.f32.mrb[0].mxu0
  %v919 = vadd.f32 0.0, %v918
  %v920 = vpop.f32.mrb[0].mxu0
  %v921 = vpop.f32.mrb[0].mxu0
  %v922 = vpop.f32.mrb[0].mxu0
  %923 = vdwg.mxu0
  %v924 = vadd.f32 %v871, %v919
  %v925 = vtanh.pop %v924
  %v926 = vmul.f32 %v925, 0.5
  %v927 = vadd.f32 %v926, 0.5
  %v928 = vmul.f32 %v927, 0.0
  %930 = vrot.lane.b32.xlu0 %v925, 64
  %v931 = vpop.permute.xlu0 %930
  %v933 = vmul.f32 %v927, %v931
  %935 = vrot.lane.b32.xlu0 %v933, 32
  %v936 = vpop.permute.xlu0 %935
  %v938 = vadd.f32 %v928, %v936
  %v939 = vtanh.pop %v938
  %941 = vrot.lane.b32.xlu0 %v939, 64
  %v942 = vpop.permute.xlu0 %941
  %v944 = vmul.f32 %v927, %v942
  %v945 = vld [vmem:[#allocation2 + $0x8] sm:$0xff]
  %v946 = vpack.c.bf16 %v944, %v944
  %948 = vrot.lane.b32.xlu0 %v946, 32
  %v949 = vpop.permute.xlu0 %948
  %v951 = vsel %vm173, %v949, 0
  %953 = vmatprep.subr.bf16.mxu0 0
  %954 = vmatpush1.bf16.msra.mxu0 %v880
  %955 = vmatprep.subr.bf16.mxu0 0
  %956 = vmatpush1.bf16.msra.mxu0 %v881
  %957 = vmatprep.subr.bf16.mxu0 0
  %958 = vmatpush1.bf16.msra.mxu0 0
  %959 = vmatprep.subr.bf16.mxu0 0
  %960 = vmatpush1.bf16.msra.mxu0 0
  %961 = vmatprep.subr.bf16.mxu0 0
  %962 = vmatpush1.bf16.msra.mxu0 0
  %963 = vmatprep.subr.bf16.mxu0 0
  %964 = vmatpush1.bf16.msra.mxu0 0
  %965 = vmatprep.subr.bf16.mxu0 0
  %966 = vmatpush1.bf16.msra.mxu0 0
  %967 = vmatprep.subr.bf16.mxu0 0
  %968 = vmatpush1.bf16.msra.mxu0 0
  %969 = vmatprep.subr.bf16.mxu0 0
  %970 = vmatpush1.bf16.msra.mxu0 0
  %971 = vmatprep.subr.bf16.mxu0 0
  %972 = vmatpush1.bf16.msra.mxu0 0
  %973 = vmatprep.subr.bf16.mxu0 0
  %974 = vmatpush1.bf16.msra.mxu0 0
  %975 = vmatprep.subr.bf16.mxu0 0
  %976 = vmatpush1.bf16.msra.mxu0 0
  %977 = vmatprep.subr.bf16.mxu0 0
  %978 = vmatpush1.bf16.msra.mxu0 0
  %979 = vmatprep.subr.bf16.mxu0 0
  %980 = vmatpush1.bf16.msra.mxu0 0
  %981 = vmatprep.subr.bf16.mxu0 0
  %982 = vmatpush1.bf16.msra.mxu0 0
  %983 = vmatprep.subr.bf16.mxu0 0
  %984 = vmatpush1.bf16.msra.mxu0 0
  %985 = vmatprep.mubr.bf16.mxu0 0
  %986 = vmatmul.mubr.bf16.gmra.mrb[0].mxu0 %v951
  %v987 = vpop.f32.mrb[0].mxu0
  %v988 = vadd.f32 0.0, %v987
  %v989 = vpop.f32.mrb[0].mxu0
  %v990 = vpop.f32.mrb[0].mxu0
  %v991 = vpop.f32.mrb[0].mxu0
  %992 = vdwg.mxu0
  %v993 = vadd.f32 %v945, %v988
  %v994 = vtanh.pop %v993
  %v995 = vmul.f32 %v994, 0.5
  %v996 = vadd.f32 %v995, 0.5
  %v997 = vmul.f32 %v996, %v938
  %999 = vrot.lane.b32.xlu0 %v994, 64
  %v1000 = vpop.permute.xlu0 %999
  %v1002 = vmul.f32 %v996, %v1000
  %1004 = vrot.lane.b32.xlu0 %v1002, 32
  %v1005 = vpop.permute.xlu0 %1004
  %v1007 = vadd.f32 %v997, %v1005
  %v1008 = vtanh.pop %v1007
  %1010 = vrot.lane.b32.xlu0 %v1008, 64
  %v1011 = vpop.permute.xlu0 %1010
  %v1013 = vmul.f32 %v996, %v1011
  %v1014 = vld [vmem:[#allocation2 + $0x10] sm:$0xff]
  %v1015 = vpack.c.bf16 %v1013, %v1013
  %1017 = vrot.lane.b32.xlu0 %v1015, 32
  %v1018 = vpop.permute.xlu0 %1017
  %v1020 = vsel %vm173, %v1018, 0
  %1022 = vmatprep.subr.bf16.mxu0 0
  %1023 = vmatpush1.bf16.msra.mxu0 %v880
  %1024 = vmatprep.subr.bf16.mxu0 0
  %1025 = vmatpush1.bf16.msra.mxu0 %v881
  %1026 = vmatprep.subr.bf16.mxu0 0
  %1027 = vmatpush1.bf16.msra.mxu0 0
  %1028 = vmatprep.subr.bf16.mxu0 0
  %1029 = vmatpush1.bf16.msra.mxu0 0
  %1030 = vmatprep.subr.bf16.mxu0 0
  %1031 = vmatpush1.bf16.msra.mxu0 0
  %1032 = vmatprep.subr.bf16.mxu0 0
  %1033 = vmatpush1.bf16.msra.mxu0 0
  %1034 = vmatprep.subr.bf16.mxu0 0
  %1035 = vmatpush1.bf16.msra.mxu0 0
  %1036 = vmatprep.subr.bf16.mxu0 0
  %1037 = vmatpush1.bf16.msra.mxu0 0
  %1038 = vmatprep.subr.bf16.mxu0 0
  %1039 = vmatpush1.bf16.msra.mxu0 0
  %1040 = vmatprep.subr.bf16.mxu0 0
  %1041 = vmatpush1.bf16.msra.mxu0 0
  %1042 = vmatprep.subr.bf16.mxu0 0
  %1043 = vmatpush1.bf16.msra.mxu0 0
  %1044 = vmatprep.subr.bf16.mxu0 0
  %1045 = vmatpush1.bf16.msra.mxu0 0
  %1046 = vmatprep.subr.bf16.mxu0 0
  %1047 = vmatpush1.bf16.msra.mxu0 0
  %1048 = vmatprep.subr.bf16.mxu0 0
  %1049 = vmatpush1.bf16.msra.mxu0 0
  %1050 = vmatprep.subr.bf16.mxu0 0
  %1051 = vmatpush1.bf16.msra.mxu0 0
  %1052 = vmatprep.subr.bf16.mxu0 0
  %1053 = vmatpush1.bf16.msra.mxu0 0
  %1054 = vmatprep.mubr.bf16.mxu0 0
  %1055 = vmatmul.mubr.bf16.gmra.mrb[0].mxu0 %v1020
  %v1056 = vpop.f32.mrb[0].mxu0
  %v1057 = vadd.f32 0.0, %v1056
  %v1058 = vpop.f32.mrb[0].mxu0
  %v1059 = vpop.f32.mrb[0].mxu0
  %v1060 = vpop.f32.mrb[0].mxu0
  %1061 = vdwg.mxu0
  %v1062 = vadd.f32 %v1014, %v1057
  %v1063 = vtanh.pop %v1062
  %v1064 = vmul.f32 %v1063, 0.5
  %v1065 = vadd.f32 %v1064, 0.5
  %v1066 = vmul.f32 %v1065, %v1007
  %1068 = vrot.lane.b32.xlu0 %v1063, 64
  %v1069 = vpop.permute.xlu0 %1068
  %v1071 = vmul.f32 %v1065, %v1069
  %1073 = vrot.lane.b32.xlu0 %v1071, 32
  %v1074 = vpop.permute.xlu0 %1073
  %v1076 = vadd.f32 %v1066, %v1074
  %v1077 = vtanh.pop %v1076
  %1079 = vrot.lane.b32.xlu0 %v1077, 64
  %v1080 = vpop.permute.xlu0 %1079
  %v1082 = vmul.f32 %v1065, %v1080
  %v1083 = vld [vmem:[#allocation2 + $0x18] sm:$0xff]
  %v1084 = vpack.c.bf16 %v1082, %v1082
  %1086 = vrot.lane.b32.xlu0 %v1084, 32
  %v1087 = vpop.permute.xlu0 %1086
  %v1089 = vsel %vm173, %v1087, 0
  %1091 = vmatprep.subr.bf16.mxu0 0
  %1092 = vmatpush1.bf16.msra.mxu0 %v880
  %1093 = vmatprep.subr.bf16.mxu0 0
  %1094 = vmatpush1.bf16.msra.mxu0 %v881
  %1095 = vmatprep.subr.bf16.mxu0 0
  %1096 = vmatpush1.bf16.msra.mxu0 0
  %1097 = vmatprep.subr.bf16.mxu0 0
  %1098 = vmatpush1.bf16.msra.mxu0 0
  %1099 = vmatprep.subr.bf16.mxu0 0
  %1100 = vmatpush1.bf16.msra.mxu0 0
  %1101 = vmatprep.subr.bf16.mxu0 0
  %1102 = vmatpush1.bf16.msra.mxu0 0
  %1103 = vmatprep.subr.bf16.mxu0 0
  %1104 = vmatpush1.bf16.msra.mxu0 0
  %1105 = vmatprep.subr.bf16.mxu0 0
  %1106 = vmatpush1.bf16.msra.mxu0 0
  %1107 = vmatprep.subr.bf16.mxu0 0
  %1108 = vmatpush1.bf16.msra.mxu0 0
  %1109 = vmatprep.subr.bf16.mxu0 0
  %1110 = vmatpush1.bf16.msra.mxu0 0
  %1111 = vmatprep.subr.bf16.mxu0 0
  %1112 = vmatpush1.bf16.msra.mxu0 0
  %1113 = vmatprep.subr.bf16.mxu0 0
  %1114 = vmatpush1.bf16.msra.mxu0 0
  %1115 = vmatprep.subr.bf16.mxu0 0
  %1116 = vmatpush1.bf16.msra.mxu0 0
  %1117 = vmatprep.subr.bf16.mxu0 0
  %1118 = vmatpush1.bf16.msra.mxu0 0
  %1119 = vmatprep.subr.bf16.mxu0 0
  %1120 = vmatpush1.bf16.msra.mxu0 0
  %1121 = vmatprep.subr.bf16.mxu0 0
  %1122 = vmatpush1.bf16.msra.mxu0 0
  %1123 = vmatprep.mubr.bf16.mxu0 0
  %1124 = vmatmul.mubr.bf16.gmra.mrb[0].mxu0 %v1089
  %v1125 = vpop.f32.mrb[0].mxu0
  %v1126 = vadd.f32 0.0, %v1125
  %v1127 = vpop.f32.mrb[0].mxu0
  %v1128 = vpop.f32.mrb[0].mxu0
  %v1129 = vpop.f32.mrb[0].mxu0
  %1130 = vdwg.mxu0
  %v1131 = vadd.f32 %v1083, %v1126
  %v1132 = vtanh.pop %v1131
  %v1133 = vmul.f32 %v1132, 0.5
  %v1134 = vadd.f32 %v1133, 0.5
  %v1135 = vmul.f32 %v1134, %v1076
  %1137 = vrot.lane.b32.xlu0 %v1132, 64
  %v1138 = vpop.permute.xlu0 %1137
  %v1140 = vmul.f32 %v1134, %v1138
  %1142 = vrot.lane.b32.xlu0 %v1140, 32
  %v1143 = vpop.permute.xlu0 %1142
  %v1145 = vadd.f32 %v1135, %v1143
  %v1146 = vtanh.pop %v1145
  %1148 = vrot.lane.b32.xlu0 %v1146, 64
  %v1149 = vpop.permute.xlu0 %1148
  %v1151 = vmul.f32 %v1134, %v1149
  %v1152 = vld [vmem:[#allocation2 + $0x20] sm:$0xff]
  %v1153 = vpack.c.bf16 %v1151, %v1151
  %1155 = vrot.lane.b32.xlu0 %v1153, 32
  %v1156 = vpop.permute.xlu0 %1155
  %v1158 = vsel %vm173, %v1156, 0
  %1160 = vmatprep.subr.bf16.mxu0 0
  %1161 = vmatpush1.bf16.msra.mxu0 %v880
  %1162 = vmatprep.subr.bf16.mxu0 0
  %1163 = vmatpush1.bf16.msra.mxu0 %v881
  %1164 = vmatprep.subr.bf16.mxu0 0
  %1165 = vmatpush1.bf16.msra.mxu0 0
  %1166 = vmatprep.subr.bf16.mxu0 0
  %1167 = vmatpush1.bf16.msra.mxu0 0
  %1168 = vmatprep.subr.bf16.mxu0 0
  %1169 = vmatpush1.bf16.msra.mxu0 0
  %1170 = vmatprep.subr.bf16.mxu0 0
  %1171 = vmatpush1.bf16.msra.mxu0 0
  %1172 = vmatprep.subr.bf16.mxu0 0
  %1173 = vmatpush1.bf16.msra.mxu0 0
  %1174 = vmatprep.subr.bf16.mxu0 0
  %1175 = vmatpush1.bf16.msra.mxu0 0
  %1176 = vmatprep.subr.bf16.mxu0 0
  %1177 = vmatpush1.bf16.msra.mxu0 0
  %1178 = vmatprep.subr.bf16.mxu0 0
  %1179 = vmatpush1.bf16.msra.mxu0 0
  %1180 = vmatprep.subr.bf16.mxu0 0
  %1181 = vmatpush1.bf16.msra.mxu0 0
  %1182 = vmatprep.subr.bf16.mxu0 0
  %1183 = vmatpush1.bf16.msra.mxu0 0
  %1184 = vmatprep.subr.bf16.mxu0 0
  %1185 = vmatpush1.bf16.msra.mxu0 0
  %1186 = vmatprep.subr.bf16.mxu0 0
  %1187 = vmatpush1.bf16.msra.mxu0 0
  %1188 = vmatprep.subr.bf16.mxu0 0
  %1189 = vmatpush1.bf16.msra.mxu0 0
  %1190 = vmatprep.subr.bf16.mxu0 0
  %1191 = vmatpush1.bf16.msra.mxu0 0
  %1192 = vmatprep.mubr.bf16.mxu0 0
  %1193 = vmatmul.mubr.bf16.gmra.mrb[0].mxu0 %v1158
  %v1194 = vpop.f32.mrb[0].mxu0
  %v1195 = vadd.f32 0.0, %v1194
  %v1196 = vpop.f32.mrb[0].mxu0
  %v1197 = vpop.f32.mrb[0].mxu0
  %v1198 = vpop.f32.mrb[0].mxu0
  %1199 = vdwg.mxu0
  %v1200 = vadd.f32 %v1152, %v1195
  %v1201 = vtanh.pop %v1200
  %v1202 = vmul.f32 %v1201, 0.5
  %v1203 = vadd.f32 %v1202, 0.5
  %v1204 = vmul.f32 %v1203, %v1145
  %1206 = vrot.lane.b32.xlu0 %v1201, 64
  %v1207 = vpop.permute.xlu0 %1206
  %v1209 = vmul.f32 %v1203, %v1207
  %1211 = vrot.lane.b32.xlu0 %v1209, 32
  %v1212 = vpop.permute.xlu0 %1211
  %v1214 = vadd.f32 %v1204, %v1212
  %v1215 = vtanh.pop %v1214
  %1217 = vrot.lane.b32.xlu0 %v1215, 64
  %v1218 = vpop.permute.xlu0 %1217
  %v1220 = vmul.f32 %v1203, %v1218
  %v1221 = vld [vmem:[#allocation2 + $0x28] sm:$0xff]
  %v1222 = vpack.c.bf16 %v1220, %v1220
  %1224 = vrot.lane.b32.xlu0 %v1222, 32
  %v1225 = vpop.permute.xlu0 %1224
  %v1227 = vsel %vm173, %v1225, 0
  %1229 = vmatprep.subr.bf16.mxu0 0
  %1230 = vmatpush1.bf16.msra.mxu0 %v880
  %1231 = vmatprep.subr.bf16.mxu0 0
  %1232 = vmatpush1.bf16.msra.mxu0 %v881
  %1233 = vmatprep.subr.bf16.mxu0 0
  %1234 = vmatpush1.bf16.msra.mxu0 0
  %1235 = vmatprep.subr.bf16.mxu0 0
  %1236 = vmatpush1.bf16.msra.mxu0 0
  %1237 = vmatprep.subr.bf16.mxu0 0
  %1238 = vmatpush1.bf16.msra.mxu0 0
  %1239 = vmatprep.subr.bf16.mxu0 0
  %1240 = vmatpush1.bf16.msra.mxu0 0
  %1241 = vmatprep.subr.bf16.mxu0 0
  %1242 = vmatpush1.bf16.msra.mxu0 0
  %1243 = vmatprep.subr.bf16.mxu0 0
  %1244 = vmatpush1.bf16.msra.mxu0 0
  %1245 = vmatprep.subr.bf16.mxu0 0
  %1246 = vmatpush1.bf16.msra.mxu0 0
  %1247 = vmatprep.subr.bf16.mxu0 0
  %1248 = vmatpush1.bf16.msra.mxu0 0
  %1249 = vmatprep.subr.bf16.mxu0 0
  %1250 = vmatpush1.bf16.msra.mxu0 0
  %1251 = vmatprep.subr.bf16.mxu0 0
  %1252 = vmatpush1.bf16.msra.mxu0 0
  %1253 = vmatprep.subr.bf16.mxu0 0
  %1254 = vmatpush1.bf16.msra.mxu0 0
  %1255 = vmatprep.subr.bf16.mxu0 0
  %1256 = vmatpush1.bf16.msra.mxu0 0
  %1257 = vmatprep.subr.bf16.mxu0 0
  %1258 = vmatpush1.bf16.msra.mxu0 0
  %1259 = vmatprep.subr.bf16.mxu0 0
  %1260 = vmatpush1.bf16.msra.mxu0 0
  %1261 = vmatprep.mubr.bf16.mxu0 0
  %1262 = vmatmul.mubr.bf16.gmra.mrb[0].mxu0 %v1227
  %v1263 = vpop.f32.mrb[0].mxu0
  %v1264 = vadd.f32 0.0, %v1263
  %v1265 = vpop.f32.mrb[0].mxu0
  %v1266 = vpop.f32.mrb[0].mxu0
  %v1267 = vpop.f32.mrb[0].mxu0
  %1268 = vdwg.mxu0
  %v1269 = vadd.f32 %v1221, %v1264
  %v1270 = vtanh.pop %v1269
  %v1271 = vmul.f32 %v1270, 0.5
  %v1272 = vadd.f32 %v1271, 0.5
  %v1273 = vmul.f32 %v1272, %v1214
  %1275 = vrot.lane.b32.xlu0 %v1270, 64
  %v1276 = vpop.permute.xlu0 %1275
  %v1278 = vmul.f32 %v1272, %v1276
  %1280 = vrot.lane.b32.xlu0 %v1278, 32
  %v1281 = vpop.permute.xlu0 %1280
  %v1283 = vadd.f32 %v1273, %v1281
  %v1284 = vtanh.pop %v1283
  %1286 = vrot.lane.b32.xlu0 %v1284, 64
  %v1287 = vpop.permute.xlu0 %1286
  %v1289 = vmul.f32 %v1272, %v1287
  %v1290 = vld [vmem:[#allocation2 + $0x30] sm:$0xff]
  %v1291 = vpack.c.bf16 %v1289, %v1289
  %1293 = vrot.lane.b32.xlu0 %v1291, 32
  %v1294 = vpop.permute.xlu0 %1293
  %v1296 = vsel %vm173, %v1294, 0
  %1298 = vmatprep.subr.bf16.mxu0 0
  %1299 = vmatpush1.bf16.msra.mxu0 %v880
  %1300 = vmatprep.subr.bf16.mxu0 0
  %1301 = vmatpush1.bf16.msra.mxu0 %v881
  %1302 = vmatprep.subr.bf16.mxu0 0
  %1303 = vmatpush1.bf16.msra.mxu0 0
  %1304 = vmatprep.subr.bf16.mxu0 0
  %1305 = vmatpush1.bf16.msra.mxu0 0
  %1306 = vmatprep.subr.bf16.mxu0 0
  %1307 = vmatpush1.bf16.msra.mxu0 0
  %1308 = vmatprep.subr.bf16.mxu0 0
  %1309 = vmatpush1.bf16.msra.mxu0 0
  %1310 = vmatprep.subr.bf16.mxu0 0
  %1311 = vmatpush1.bf16.msra.mxu0 0
  %1312 = vmatprep.subr.bf16.mxu0 0
  %1313 = vmatpush1.bf16.msra.mxu0 0
  %1314 = vmatprep.subr.bf16.mxu0 0
  %1315 = vmatpush1.bf16.msra.mxu0 0
  %1316 = vmatprep.subr.bf16.mxu0 0
  %1317 = vmatpush1.bf16.msra.mxu0 0
  %1318 = vmatprep.subr.bf16.mxu0 0
  %1319 = vmatpush1.bf16.msra.mxu0 0
  %1320 = vmatprep.subr.bf16.mxu0 0
  %1321 = vmatpush1.bf16.msra.mxu0 0
  %1322 = vmatprep.subr.bf16.mxu0 0
  %1323 = vmatpush1.bf16.msra.mxu0 0
  %1324 = vmatprep.subr.bf16.mxu0 0
  %1325 = vmatpush1.bf16.msra.mxu0 0
  %1326 = vmatprep.subr.bf16.mxu0 0
  %1327 = vmatpush1.bf16.msra.mxu0 0
  %1328 = vmatprep.subr.bf16.mxu0 0
  %1329 = vmatpush1.bf16.msra.mxu0 0
  %1330 = vmatprep.mubr.bf16.mxu0 0
  %1331 = vmatmul.mubr.bf16.gmra.mrb[0].mxu0 %v1296
  %v1332 = vpop.f32.mrb[0].mxu0
  %v1333 = vadd.f32 0.0, %v1332
  %v1334 = vpop.f32.mrb[0].mxu0
  %v1335 = vpop.f32.mrb[0].mxu0
  %v1336 = vpop.f32.mrb[0].mxu0
  %1337 = vdwg.mxu0
  %v1338 = vadd.f32 %v1290, %v1333
  %v1339 = vtanh.pop %v1338
  %v1340 = vmul.f32 %v1339, 0.5
  %v1341 = vadd.f32 %v1340, 0.5
  %v1342 = vmul.f32 %v1341, %v1283
  %1344 = vrot.lane.b32.xlu0 %v1339, 64
  %v1345 = vpop.permute.xlu0 %1344
  %v1347 = vmul.f32 %v1341, %v1345
  %1349 = vrot.lane.b32.xlu0 %v1347, 32
  %v1350 = vpop.permute.xlu0 %1349
  %v1352 = vadd.f32 %v1342, %v1350
  %v1353 = vtanh.pop %v1352
  %1355 = vrot.lane.b32.xlu0 %v1353, 64
  %v1356 = vpop.permute.xlu0 %1355
  %v1358 = vmul.f32 %v1341, %v1356
  %v1359 = vld [vmem:[#allocation2 + $0x38] sm:$0xff]
  %v1360 = vpack.c.bf16 %v1358, %v1358
  %1362 = vrot.lane.b32.xlu0 %v1360, 32
  %v1363 = vpop.permute.xlu0 %1362
  %v1365 = vsel %vm173, %v1363, 0
  %1367 = vmatprep.subr.bf16.mxu0 0
  %1368 = vmatpush1.bf16.msra.mxu0 %v880
  %1369 = vmatprep.subr.bf16.mxu0 0
  %1370 = vmatpush1.bf16.msra.mxu0 %v881
  %1371 = vmatprep.subr.bf16.mxu0 0
  %1372 = vmatpush1.bf16.msra.mxu0 0
  %1373 = vmatprep.subr.bf16.mxu0 0
  %1374 = vmatpush1.bf16.msra.mxu0 0
  %1375 = vmatprep.subr.bf16.mxu0 0
  %1376 = vmatpush1.bf16.msra.mxu0 0
  %1377 = vmatprep.subr.bf16.mxu0 0
  %1378 = vmatpush1.bf16.msra.mxu0 0
  %1379 = vmatprep.subr.bf16.mxu0 0
  %1380 = vmatpush1.bf16.msra.mxu0 0
  %1381 = vmatprep.subr.bf16.mxu0 0
  %1382 = vmatpush1.bf16.msra.mxu0 0
  %1383 = vmatprep.subr.bf16.mxu0 0
  %1384 = vmatpush1.bf16.msra.mxu0 0
  %1385 = vmatprep.subr.bf16.mxu0 0
  %1386 = vmatpush1.bf16.msra.mxu0 0
  %1387 = vmatprep.subr.bf16.mxu0 0
  %1388 = vmatpush1.bf16.msra.mxu0 0
  %1389 = vmatprep.subr.bf16.mxu0 0
  %1390 = vmatpush1.bf16.msra.mxu0 0
  %1391 = vmatprep.subr.bf16.mxu0 0
  %1392 = vmatpush1.bf16.msra.mxu0 0
  %1393 = vmatprep.subr.bf16.mxu0 0
  %1394 = vmatpush1.bf16.msra.mxu0 0
  %1395 = vmatprep.subr.bf16.mxu0 0
  %1396 = vmatpush1.bf16.msra.mxu0 0
  %1397 = vmatprep.subr.bf16.mxu0 0
  %1398 = vmatpush1.bf16.msra.mxu0 0
  %1399 = vmatprep.mubr.bf16.mxu0 0
  %1400 = vmatmul.mubr.bf16.gmra.mrb[0].mxu0 %v1365
  %v1401 = vpop.f32.mrb[0].mxu0
  %v1402 = vadd.f32 0.0, %v1401
  %v1403 = vpop.f32.mrb[0].mxu0
  %v1404 = vpop.f32.mrb[0].mxu0
  %v1405 = vpop.f32.mrb[0].mxu0
  %1406 = vdwg.mxu0
  %v1407 = vadd.f32 %v1359, %v1402
  %v1408 = vtanh.pop %v1407
  %v1409 = vmul.f32 %v1408, 0.5
  %v1410 = vadd.f32 %v1409, 0.5
  %v1411 = vmul.f32 %v1410, %v1352
  %1413 = vrot.lane.b32.xlu0 %v1408, 64
  %v1414 = vpop.permute.xlu0 %1413
  %v1416 = vmul.f32 %v1410, %v1414
  %1418 = vrot.lane.b32.xlu0 %v1416, 32
  %v1419 = vpop.permute.xlu0 %1418
  %v1421 = vadd.f32 %v1411, %v1419
  %v1422 = vtanh.pop %v1421
  %1424 = vrot.lane.b32.xlu0 %v1422, 64
  %v1425 = vpop.permute.xlu0 %1424
  %v1427 = vmul.f32 %v1410, %v1425
  %v1428 = vpack.c.bf16 %v1427, %v1427
  %v1429 = vld [vmem:[%s5] sm:$0xf]
  %v1430 = vld [vmem:[%s5 + $0x4] sm:$0xf]
  %v1431 = vld [vmem:[%s5 + $0x8] sm:$0xf]
  %v1432 = vld [vmem:[%s5 + $0xc] sm:$0xf]
  %v1433 = vld [vmem:[%s6] sm:$0x1]
  %v1435 = vlaneseq
  %v1436 = vshrl.u32 %v1435, 7
  %v1437 = vsub.s32 0, %v1436
  %v1438 = vrot.slane %v1433, %v1437
  %1441 = vrot.lane.b32.xlu0 %v1428, 32
  %v1442 = vpop.permute.xlu0 %1441
  %v1447 = vunpack.c.l.b16 %v1429
  %v1448 = vunpack.c.l.b16 %v1430
  %v1449 = vunpack.c.l.b16 %v1431
  %v1450 = vunpack.c.l.b16 %v1432
  %v1451 = vpack.c.b16 %v1448, %v1447
  %v1452 = vpack.c.b16 %v1450, %v1449
  %v1456 = vsel %vm173, %v1442, 0
  %1458 = vmatprep.subr.bf16.mxu0 0
  %1459 = vmatpush1.bf16.msra.mxu0 %v1451
  %1460 = vmatprep.subr.bf16.mxu0 0
  %1461 = vmatpush1.bf16.msra.mxu0 %v1452
  %1462 = vmatprep.subr.bf16.mxu0 0
  %1463 = vmatpush1.bf16.msra.mxu0 0
  %1464 = vmatprep.subr.bf16.mxu0 0
  %1465 = vmatpush1.bf16.msra.mxu0 0
  %1466 = vmatprep.subr.bf16.mxu0 0
  %1467 = vmatpush1.bf16.msra.mxu0 0
  %1468 = vmatprep.subr.bf16.mxu0 0
  %1469 = vmatpush1.bf16.msra.mxu0 0
  %1470 = vmatprep.subr.bf16.mxu0 0
  %1471 = vmatpush1.bf16.msra.mxu0 0
  %1472 = vmatprep.subr.bf16.mxu0 0
  %1473 = vmatpush1.bf16.msra.mxu0 0
  %1474 = vmatprep.subr.bf16.mxu0 0
  %1475 = vmatpush1.bf16.msra.mxu0 0
  %1476 = vmatprep.subr.bf16.mxu0 0
  %1477 = vmatpush1.bf16.msra.mxu0 0
  %1478 = vmatprep.subr.bf16.mxu0 0
  %1479 = vmatpush1.bf16.msra.mxu0 0
  %1480 = vmatprep.subr.bf16.mxu0 0
  %1481 = vmatpush1.bf16.msra.mxu0 0
  %1482 = vmatprep.subr.bf16.mxu0 0
  %1483 = vmatpush1.bf16.msra.mxu0 0
  %1484 = vmatprep.subr.bf16.mxu0 0
  %1485 = vmatpush1.bf16.msra.mxu0 0
  %1486 = vmatprep.subr.bf16.mxu0 0
  %1487 = vmatpush1.bf16.msra.mxu0 0
  %1488 = vmatprep.subr.bf16.mxu0 0
  %1489 = vmatpush1.bf16.msra.mxu0 0
  %1490 = vmatprep.mubr.bf16.mxu0 0
  %1491 = vmatmul.mubr.bf16.gmra.mrb[0].mxu0 %v1456
  %v1492 = vpop.f32.mrb[0].mxu0
  %v1493 = vadd.f32 %v1438, %v1492
  %v1494 = vpop.f32.mrb[0].mxu0
  %v1495 = vpop.f32.mrb[0].mxu0
  %v1496 = vpop.f32.mrb[0].mxu0
  %1497 = vdwg.mxu0
  %vm1498 = vcmask 64512
  %1499 = vst.msk [vmem:[%s7] sm:$0xff] %vm1498, %v1493
  // Predicated region
  $region30: #{lstm_forward.1} parent=0 // pred_check
    _
  $region31: #{lstm_forward.1} parent=0 // pred_check_branch
    %1501 = sbr.rel (0) target = $region33
  $region32: #{lstm_forward.1} parent=0 // pred_region
    _
  $region33: #{lstm_forward.1} parent=0 // pred_fallthru
    _
  // Predicated region
  $region34: #{lstm_forward.1} parent=0 // pred_check
    _
  $region35: #{lstm_forward.1} parent=0 // pred_check_branch
    %1503 = sbr.rel (0) target = $region37
  $region36: #{lstm_forward.1} parent=0 // pred_region
    _
  $region37: #{lstm_forward.1} parent=0 // pred_fallthru
    _

</llo_original>
